<compile_context>
chip_gen: v5e
topology: v5e:2x2
jax: 0.10.0
libtpu: 0.0.40
codegen_flags: <defaults>
</compile_context>

<pallas_src>
import math
from functools import partial

import jax
import jax.numpy as jnp
from jax import lax
from jax.experimental import pallas as pl
from jax.experimental.pallas import tpu as pltpu

D_K = 64
D_V = 64
D_MODEL = 30
N_HEADS = 8
_LN_EPS = 1e-5


# ---------------------------------------------------------------------------
# Fused kernel: per (batch, query-tile) projections + attention + fc + LN
# ---------------------------------------------------------------------------
def _mha_kernel(xq_ref, xk_ref, xv_ref, mask_ref,
                wq_ref, wk_ref, wv_ref, wfc_ref,
                out_ref, attn_ref, ctx_ref):
    xq = xq_ref[0]                                   # [TQ, d_model] f32 (residual)
    xqb = xq.astype(jnp.bfloat16)
    xkb = xk_ref[0].astype(jnp.bfloat16)             # [S, d_model]
    xvb = xv_ref[0].astype(jnp.bfloat16)             # [S, d_model]

    # Additive mask bias (hoisted out of the head loop). Numerically identical
    # to masked_fill(-10000.) after softmax: masked logits underflow to 0.
    bias = jnp.float32(-10000.0) * mask_ref[0].astype(jnp.float32)   # [TQ, S]

    # Fused head projections on the MXU: bf16 operands, f32 accumulation.
    # 1/sqrt(d_k) is pre-folded into wq_t (exact: division by 8).
    q = jnp.dot(xqb, wq_ref[...], preferred_element_type=jnp.float32)  # [TQ, H*d_k]
    k = jnp.dot(xkb, wk_ref[...], preferred_element_type=jnp.float32)  # [S,  H*d_k]
    v = jnp.dot(xvb, wv_ref[...], preferred_element_type=jnp.float32)  # [S,  H*d_v]
    qb = q.astype(jnp.bfloat16)
    kb = k.astype(jnp.bfloat16)
    vb = v.astype(jnp.bfloat16)

    dn = (((1,), (1,)), ((), ()))     # contract last dims: no explicit k.T
    for h in range(N_HEADS):          # static unroll, traced once
        qh = qb[:, h * D_K:(h + 1) * D_K]    # [TQ, d_k]
        kh = kb[:, h * D_K:(h + 1) * D_K]    # [S,  d_k]
        vh = vb[:, h * D_V:(h + 1) * D_V]    # [S,  d_v]

        scores = lax.dot_general(qh, kh, dn,
                                 preferred_element_type=jnp.float32) + bias
        # numerically-stable softmax; divide -> EUP reciprocal-multiply
        smax = jnp.max(scores, axis=-1, keepdims=True)
        e = jnp.exp(scores - smax)
        inv = pl.reciprocal(jnp.sum(e, axis=-1, keepdims=True), approx=True)
        attn_h = e * inv                                            # [TQ, S]

        attn_ref[0, h] = attn_h.astype(attn_ref.dtype)
        ctx_ref[:, h * D_V:(h + 1) * D_V] = jnp.dot(
            attn_h.astype(jnp.bfloat16), vh,
            preferred_element_type=jnp.float32).astype(ctx_ref.dtype)

    # fc projection + residual (residual == input_Q slice) + LayerNorm epilogue.
    # The PyTorch module builds a *fresh* nn.LayerNorm in forward => gamma=1, beta=0.
    y = jnp.dot(ctx_ref[...], wfc_ref[...],
                preferred_element_type=jnp.float32) + xq
    mean = jnp.mean(y, axis=-1, keepdims=True)
    var = jnp.mean((y - mean) ** 2, axis=-1, keepdims=True)
    out_ref[0] = ((y - mean) * lax.rsqrt(var + jnp.float32(_LN_EPS))
                  ).astype(out_ref.dtype)


# ---------------------------------------------------------------------------
# Wrapper
# ---------------------------------------------------------------------------
def prepare_params(params):
    """Hoist weight re-layout / scaling / bf16 cast out of the forward path."""
    inv_sqrt_dk = 1.0 / math.sqrt(D_K)        # 1/8, exact in bf16
    return {
        "wq_t": (params["W_Q"].T * inv_sqrt_dk).astype(jnp.bfloat16),  # [30, 512]
        "wk_t": params["W_K"].T.astype(jnp.bfloat16),                   # [30, 512]
        "wv_t": params["W_V"].T.astype(jnp.bfloat16),                   # [30, 512]
        "wfc_t": params["fc"].T.astype(jnp.bfloat16),                   # [512, 30]
    }


def _pick_tq(S):
    """Query-tile size: whole sequence for small S, <=256 otherwise."""
    if S <= 256:
        return S
    for tq in (256, 128, 64, 32, 16, 8):
        if S % tq == 0:
            return tq
    return S   # odd S: single query tile per batch


def _vmem_bytes_estimate(S, TQ, attn_itemsize):
    # double-buffered pipeline blocks
    blocks = 2 * (TQ * D_MODEL * 4                    # q tile
                  + 2 * S * D_MODEL * 4               # k, v inputs
                  + TQ * S * 2                        # mask (bf16)
                  + N_HEADS * TQ * S * attn_itemsize  # attn out
                  + TQ * D_MODEL * 4)                 # out tile
    weights = 2 * (3 * D_MODEL * N_HEADS * D_K + N_HEADS * D_V * D_MODEL) * 2
    scratch = TQ * N_HEADS * D_V * 2
    temps = (TQ + 2 * S) * N_HEADS * D_K * 4 + 2 * TQ * S * 4   # q/k/v proj, scores
    return blocks + weights + scratch + temps


@partial(jax.jit, static_argnames=("attn_dtype",))
def multi_head_attention(input_Q, input_K, input_V, attn_mask, prep,
                         attn_dtype=jnp.bfloat16):
    """Forward pass of the PyTorch MultiHeadAttention module.

    input_Q/K/V : [B, S, d_model] float32
    attn_mask   : [B, S, S] bool (True == masked)
    prep        : dict from prepare_params()
    attn_dtype  : dtype of the returned attention probabilities (bf16 default
                  halves the dominant HBM writeback; pass jnp.float32 for exact)
    returns     : (output [B, S, d_model] f32, attn [B, n_heads, S, S] attn_dtype)
    """
    B, S, _ = input_Q.shape
    mask_b = attn_mask.astype(jnp.bfloat16)        # 0/1 exact, half the HBM read

    TQ = _pick_tq(S)
    n_qt = pl.cdiv(S, TQ)
    attn_itemsize = jnp.dtype(attn_dtype).itemsize

    xq_spec = pl.BlockSpec((1, TQ, D_MODEL), lambda b, t: (b, t, 0))
    xkv_spec = pl.BlockSpec((1, S, D_MODEL), lambda b, t: (b, 0, 0))
    m_spec = pl.BlockSpec((1, TQ, S), lambda b, t: (b, t, 0))
    wqkv_spec = pl.BlockSpec((D_MODEL, N_HEADS * D_K), lambda b, t: (0, 0))
    wfc_spec = pl.BlockSpec((N_HEADS * D_V, D_MODEL), lambda b, t: (0, 0))

    # advisory cost hint for XLA's scheduler
    flops = int(2 * B * (
        S * D_MODEL * N_HEADS * D_K                    # Q projection
        + 2 * int(n_qt) * S * D_MODEL * N_HEADS * D_K  # K/V proj (per q-tile)
        + 2 * N_HEADS * S * S * D_K                    # scores + attn@V
        + S * N_HEADS * D_V * D_MODEL))                # fc
    cost = pl.CostEstimate(
        flops=flops,
        transcendentals=int(B * N_HEADS * S * S),
        bytes_accessed=int(B * (3 * S * D_MODEL * 4 + S * S * 2
                                + N_HEADS * S * S * attn_itemsize
                                + S * D_MODEL * 4)
                           + (3 * D_MODEL * N_HEADS * D_K
                              + N_HEADS * D_V * D_MODEL) * 2))

    # raise the scoped VMEM limit only if the block footprint needs it (v5e)
    est = _vmem_bytes_estimate(S, TQ, attn_itemsize)
    vmem_limit = None
    if est > 30 * 1024 * 1024:
        vmem_limit = min(int(est * 1.25), 100 * 1024 * 1024)
    # TODO(synk): for very long sequences (S >> 4096) tile the KV axis
    # flash-style (online softmax) instead of keeping full K/V resident.

    out, attn = pl.pallas_call(
        _mha_kernel,
        out_shape=(
            jax.ShapeDtypeStruct((B, S, D_MODEL), jnp.float32),
            jax.ShapeDtypeStruct((B, N_HEADS, S, S), attn_dtype),
        ),
        grid_spec=pltpu.PrefetchScalarGridSpec(
            num_scalar_prefetch=0,
            grid=(B, n_qt),
            in_specs=[xq_spec, xkv_spec, xkv_spec, m_spec,
                      wqkv_spec, wqkv_spec, wqkv_spec, wfc_spec],
            out_specs=(
                pl.BlockSpec((1, TQ, D_MODEL), lambda b, t: (b, t, 0)),
                pl.BlockSpec((1, N_HEADS, TQ, S), lambda b, t: (b, 0, t, 0)),
            ),
            scratch_shapes=[pltpu.VMEM((TQ, N_HEADS * D_V), jnp.bfloat16)],
        ),
        compiler_params=pltpu.CompilerParams(
            dimension_semantics=("parallel", "parallel"),
            vmem_limit_bytes=vmem_limit),
        cost_estimate=cost,
    )(input_Q, input_K, input_V, mask_b,
      prep["wq_t"], prep["wk_t"], prep["wv_t"], prep["wfc_t"])
    return out, attn


def init_params(key):
    kq, kk, kv, kf = jax.random.split(key, 4)
    scale = 0.05
    return {
        "W_Q": scale * jax.random.normal(kq, (N_HEADS * D_K, D_MODEL), jnp.float32),
        "W_K": scale * jax.random.normal(kk, (N_HEADS * D_K, D_MODEL), jnp.float32),
        "W_V": scale * jax.random.normal(kv, (N_HEADS * D_V, D_MODEL), jnp.float32),
        "fc": scale * jax.random.normal(kf, (D_MODEL, N_HEADS * D_V), jnp.float32),
    }


# ---------------------------------------------------------------------------
# Pure-JAX reference (mirrors the PyTorch code) for a correctness check
# ---------------------------------------------------------------------------
def _reference(input_Q, input_K, input_V, attn_mask, params):
    B, S, _ = input_Q.shape
    q = (input_Q @ params["W_Q"].T).reshape(B, S, N_HEADS, D_K).transpose(0, 2, 1, 3)
    k = (input_K @ params["W_K"].T).reshape(B, S, N_HEADS, D_K).transpose(0, 2, 1, 3)
    v = (input_V @ params["W_V"].T).reshape(B, S, N_HEADS, D_V).transpose(0, 2, 1, 3)
    mask = attn_mask[:, None, :, :]
    scores = (q @ jnp.swapaxes(k, -1, -2)) / math.sqrt(D_K)
    scores = jnp.where(mask, -10000.0, scores)
    attn = jax.nn.softmax(scores, axis=-1)
    ctx = attn @ v
    ctx = ctx.transpose(0, 2, 1, 3).reshape(B, S, N_HEADS * D_V)
    out = ctx @ params["fc"].T + input_Q
    mean = out.mean(-1, keepdims=True)
    var = ((out - mean) ** 2).mean(-1, keepdims=True)
    out = (out - mean) / jnp.sqrt(var + 1e-5)
    return out, attn


if __name__ == "__main__":
    key = jax.random.PRNGKey(0)
    kp, kq, kk, kv, km = jax.random.split(key, 5)

    B, S = 2, 8   # small demo shapes (not representative for perf measurement)
    params = init_params(kp)
    prep = prepare_params(params)

    input_Q = jax.random.normal(kq, (B, S, D_MODEL), jnp.float32)
    input_K = jax.random.normal(kk, (B, S, D_MODEL), jnp.float32)
    input_V = jax.random.normal(kv, (B, S, D_MODEL), jnp.float32)
    attn_mask = jax.random.uniform(km, (B, S, S)) < 0.3   # bool, True == masked

    out, attn = multi_head_attention(input_Q, input_K, input_V, attn_mask, prep)
    out = jax.block_until_ready(out)
    attn = jax.block_until_ready(attn)

    ref_out, ref_attn = _reference(input_Q, input_K, input_V, attn_mask, params)
    assert out.shape == (B, S, D_MODEL) and attn.shape == (B, N_HEADS, S, S)
    # bf16 MXU operands + bf16 attn output + approx reciprocal => loosened tolerances
    assert jnp.allclose(out, ref_out, atol=5e-2, rtol=5e-2)
    assert jnp.allclose(attn.astype(jnp.float32), ref_attn, atol=2e-2, rtol=2e-2)

    print("KERNEL_OK")
</pallas_src>

<mosaic_0001>
module attributes {stable_mosaic.version = 11 : i64} {
  func.func @_mha_kernel(%arg0: i32, %arg1: i32, %arg2: memref<1x8x30xf32, #tpu.memory_space<vmem>>, %arg3: memref<1x8x30xf32, #tpu.memory_space<vmem>>, %arg4: memref<1x8x30xf32, #tpu.memory_space<vmem>>, %arg5: memref<1x8x8xbf16, #tpu.memory_space<vmem>>, %arg6: memref<30x512xbf16, #tpu.memory_space<vmem>>, %arg7: memref<30x512xbf16, #tpu.memory_space<vmem>>, %arg8: memref<30x512xbf16, #tpu.memory_space<vmem>>, %arg9: memref<512x30xbf16, #tpu.memory_space<vmem>>, %arg10: memref<1x8x30xf32, #tpu.memory_space<vmem>>, %arg11: memref<1x8x8x8xbf16, #tpu.memory_space<vmem>>, %arg12: memref<8x512xbf16, #tpu.memory_space<vmem>>) attributes {dimension_semantics = [#tpu.dimension_semantics<parallel>, #tpu.dimension_semantics<parallel>], iteration_bounds = array<i64: 2, 1>, scalar_prefetch = 0 : i64, scratch_operands = 1 : i64, tpu.core_type = #tpu.core_type<tc>, window_params = [{transform_indices = @transform_0, window_bounds = array<i64: 1, 8, 30>}, {transform_indices = @transform_1, window_bounds = array<i64: 1, 8, 30>}, {transform_indices = @transform_2, window_bounds = array<i64: 1, 8, 30>}, {transform_indices = @transform_3, window_bounds = array<i64: 1, 8, 8>}, {pipeline_mode = #tpu.pipeline_mode<synchronous>, transform_indices = @transform_4, window_bounds = array<i64: 30, 512>}, {pipeline_mode = #tpu.pipeline_mode<synchronous>, transform_indices = @transform_5, window_bounds = array<i64: 30, 512>}, {pipeline_mode = #tpu.pipeline_mode<synchronous>, transform_indices = @transform_6, window_bounds = array<i64: 30, 512>}, {pipeline_mode = #tpu.pipeline_mode<synchronous>, transform_indices = @transform_7, window_bounds = array<i64: 512, 30>}, {transform_indices = @transform_8, window_bounds = array<i64: 1, 8, 30>}, {transform_indices = @transform_9, window_bounds = array<i64: 1, 8, 8, 8>}]} {
    %c0 = arith.constant 0 : index
    %c0_0 = arith.constant 0 : index
    %c0_1 = arith.constant 0 : index
    %0 = vector.load %arg2[%c0, %c0_0, %c0_1] : memref<1x8x30xf32, #tpu.memory_space<vmem>>, vector<1x8x30xf32>
    %1 = vector.shape_cast %0 : vector<1x8x30xf32> to vector<8x30xf32>
    %2 = arith.truncf %1 : vector<8x30xf32> to vector<8x30xbf16>
    %c0_2 = arith.constant 0 : index
    %c0_3 = arith.constant 0 : index
    %c0_4 = arith.constant 0 : index
    %3 = vector.load %arg3[%c0_2, %c0_3, %c0_4] : memref<1x8x30xf32, #tpu.memory_space<vmem>>, vector<1x8x30xf32>
    %4 = vector.shape_cast %3 : vector<1x8x30xf32> to vector<8x30xf32>
    %5 = arith.truncf %4 : vector<8x30xf32> to vector<8x30xbf16>
    %c0_5 = arith.constant 0 : index
    %c0_6 = arith.constant 0 : index
    %c0_7 = arith.constant 0 : index
    %6 = vector.load %arg4[%c0_5, %c0_6, %c0_7] : memref<1x8x30xf32, #tpu.memory_space<vmem>>, vector<1x8x30xf32>
    %7 = vector.shape_cast %6 : vector<1x8x30xf32> to vector<8x30xf32>
    %8 = arith.truncf %7 : vector<8x30xf32> to vector<8x30xbf16>
    %c0_8 = arith.constant 0 : index
    %c0_9 = arith.constant 0 : index
    %c0_10 = arith.constant 0 : index
    %9 = vector.load %arg5[%c0_8, %c0_9, %c0_10] : memref<1x8x8xbf16, #tpu.memory_space<vmem>>, vector<1x8x8xbf16>
    %10 = vector.shape_cast %9 : vector<1x8x8xbf16> to vector<8x8xbf16>
    %11 = arith.extf %10 : vector<8x8xbf16> to vector<8x8xf32>
    %cst = arith.constant -1.000000e+04 : f32
    %12 = vector.broadcast %cst : f32 to vector<8x8xf32>
    %13 = arith.mulf %12, %11 : vector<8x8xf32>
    %c0_11 = arith.constant 0 : index
    %c0_12 = arith.constant 0 : index
    %14 = vector.load %arg6[%c0_11, %c0_12] : memref<30x512xbf16, #tpu.memory_space<vmem>>, vector<30x512xbf16>
    %cst_13 = arith.constant dense<0.000000e+00> : vector<8x512xf32>
    %15 = tpu.matmul %2, %14, %cst_13 {dimension_numbers = #tpu.dot_dimension_numbers<[1], [0], [0], [1], [0, 0, 1, 1], [], []>} : vector<8x30xbf16>, vector<30x512xbf16>, vector<8x512xf32> -> vector<8x512xf32>
    %c0_14 = arith.constant 0 : index
    %c0_15 = arith.constant 0 : index
    %16 = vector.load %arg7[%c0_14, %c0_15] : memref<30x512xbf16, #tpu.memory_space<vmem>>, vector<30x512xbf16>
    %cst_16 = arith.constant dense<0.000000e+00> : vector<8x512xf32>
    %17 = tpu.matmul %5, %16, %cst_16 {dimension_numbers = #tpu.dot_dimension_numbers<[1], [0], [0], [1], [0, 0, 1, 1], [], []>} : vector<8x30xbf16>, vector<30x512xbf16>, vector<8x512xf32> -> vector<8x512xf32>
    %c0_17 = arith.constant 0 : index
    %c0_18 = arith.constant 0 : index
    %18 = vector.load %arg8[%c0_17, %c0_18] : memref<30x512xbf16, #tpu.memory_space<vmem>>, vector<30x512xbf16>
    %cst_19 = arith.constant dense<0.000000e+00> : vector<8x512xf32>
    %19 = tpu.matmul %8, %18, %cst_19 {dimension_numbers = #tpu.dot_dimension_numbers<[1], [0], [0], [1], [0, 0, 1, 1], [], []>} : vector<8x30xbf16>, vector<30x512xbf16>, vector<8x512xf32> -> vector<8x512xf32>
    %20 = arith.truncf %15 : vector<8x512xf32> to vector<8x512xbf16>
    %21 = arith.truncf %17 : vector<8x512xf32> to vector<8x512xbf16>
    %22 = arith.truncf %19 : vector<8x512xf32> to vector<8x512xbf16>
    %23 = vector.extract_strided_slice %20 {offsets = [0, 0], sizes = [8, 64], strides = [1, 1]} : vector<8x512xbf16> to vector<8x64xbf16>
    %24 = vector.extract_strided_slice %21 {offsets = [0, 0], sizes = [8, 64], strides = [1, 1]} : vector<8x512xbf16> to vector<8x64xbf16>
    %25 = vector.extract_strided_slice %22 {offsets = [0, 0], sizes = [8, 64], strides = [1, 1]} : vector<8x512xbf16> to vector<8x64xbf16>
    %cst_20 = arith.constant dense<0.000000e+00> : vector<8x8xf32>
    %26 = tpu.matmul %23, %24, %cst_20 {dimension_numbers = #tpu.dot_dimension_numbers<[1], [1], [0], [0], [0, 0, 1, 0], [], []>} : vector<8x64xbf16>, vector<8x64xbf16>, vector<8x8xf32> -> vector<8x8xf32>
    %27 = arith.addf %26, %13 : vector<8x8xf32>
    %cst_21 = arith.constant dense<0xFF800000> : vector<8xf32>
    %28 = vector.multi_reduction <maximumf>, %27, %cst_21 [1] : vector<8x8xf32> to vector<8xf32>
    %29 = vector.shape_cast %28 : vector<8xf32> to vector<8x1xf32>
    %30 = vector.broadcast %29 : vector<8x1xf32> to vector<8x8xf32>
    %31 = arith.subf %27, %30 : vector<8x8xf32>
    %32 = math.exp %31 : vector<8x8xf32>
    %cst_22 = arith.constant dense<0.000000e+00> : vector<8xf32>
    %33 = vector.multi_reduction <add>, %32, %cst_22 [1] : vector<8x8xf32> to vector<8xf32>
    %34 = vector.shape_cast %33 : vector<8xf32> to vector<8x1xf32>
    %35 = tpu.reciprocal %34 {approx = true} : vector<8x1xf32> -> vector<8x1xf32>
    %36 = vector.broadcast %35 : vector<8x1xf32> to vector<8x8xf32>
    %37 = arith.mulf %32, %36 : vector<8x8xf32>
    %38 = arith.truncf %37 : vector<8x8xf32> to vector<8x8xbf16>
    %c0_23 = arith.constant 0 : index
    %c0_24 = arith.constant 0 : index
    %c0_25 = arith.constant 0 : index
    %c0_26 = arith.constant 0 : index
    %39 = vector.load %arg11[%c0_23, %c0_24, %c0_25, %c0_26] : memref<1x8x8x8xbf16, #tpu.memory_space<vmem>>, vector<1x1x8x8xbf16>
    %40 = vector.shape_cast %39 : vector<1x1x8x8xbf16> to vector<8x8xbf16>
    %41 = vector.shape_cast %38 : vector<8x8xbf16> to vector<1x1x8x8xbf16>
    tpu.vector_store %arg11[%c0_23, %c0_24, %c0_25, %c0_26], %41 {strides = array<i32>} : memref<1x8x8x8xbf16, #tpu.memory_space<vmem>>, vector<1x1x8x8xbf16>,
    %42 = arith.truncf %37 : vector<8x8xf32> to vector<8x8xbf16>
    %cst_27 = arith.constant dense<0.000000e+00> : vector<8x64xf32>
    %43 = tpu.matmul %42, %25, %cst_27 {dimension_numbers = #tpu.dot_dimension_numbers<[1], [0], [0], [1], [0, 0, 1, 1], [], []>} : vector<8x8xbf16>, vector<8x64xbf16>, vector<8x64xf32> -> vector<8x64xf32>
    %44 = arith.truncf %43 : vector<8x64xf32> to vector<8x64xbf16>
    %c0_28 = arith.constant 0 : index
    %c0_29 = arith.constant 0 : index
    %45 = vector.load %arg12[%c0_28, %c0_29] : memref<8x512xbf16, #tpu.memory_space<vmem>>, vector<8x64xbf16>
    tpu.vector_store %arg12[%c0_28, %c0_29], %44 {strides = array<i32>} : memref<8x512xbf16, #tpu.memory_space<vmem>>, vector<8x64xbf16>,
    %46 = vector.extract_strided_slice %20 {offsets = [0, 64], sizes = [8, 64], strides = [1, 1]} : vector<8x512xbf16> to vector<8x64xbf16>
    %47 = vector.extract_strided_slice %21 {offsets = [0, 64], sizes = [8, 64], strides = [1, 1]} : vector<8x512xbf16> to vector<8x64xbf16>
    %48 = vector.extract_strided_slice %22 {offsets = [0, 64], sizes = [8, 64], strides = [1, 1]} : vector<8x512xbf16> to vector<8x64xbf16>
    %cst_30 = arith.constant dense<0.000000e+00> : vector<8x8xf32>
    %49 = tpu.matmul %46, %47, %cst_30 {dimension_numbers = #tpu.dot_dimension_numbers<[1], [1], [0], [0], [0, 0, 1, 0], [], []>} : vector<8x64xbf16>, vector<8x64xbf16>, vector<8x8xf32> -> vector<8x8xf32>
    %50 = arith.addf %49, %13 : vector<8x8xf32>
    %cst_31 = arith.constant dense<0xFF800000> : vector<8xf32>
    %51 = vector.multi_reduction <maximumf>, %50, %cst_31 [1] : vector<8x8xf32> to vector<8xf32>
    %52 = vector.shape_cast %51 : vector<8xf32> to vector<8x1xf32>
    %53 = vector.broadcast %52 : vector<8x1xf32> to vector<8x8xf32>
    %54 = arith.subf %50, %53 : vector<8x8xf32>
    %55 = math.exp %54 : vector<8x8xf32>
    %cst_32 = arith.constant dense<0.000000e+00> : vector<8xf32>
    %56 = vector.multi_reduction <add>, %55, %cst_32 [1] : vector<8x8xf32> to vector<8xf32>
    %57 = vector.shape_cast %56 : vector<8xf32> to vector<8x1xf32>
    %58 = tpu.reciprocal %57 {approx = true} : vector<8x1xf32> -> vector<8x1xf32>
    %59 = vector.broadcast %58 : vector<8x1xf32> to vector<8x8xf32>
    %60 = arith.mulf %55, %59 : vector<8x8xf32>
    %61 = arith.truncf %60 : vector<8x8xf32> to vector<8x8xbf16>
    %c0_33 = arith.constant 0 : index
    %c1 = arith.constant 1 : index
    %c0_34 = arith.constant 0 : index
    %c0_35 = arith.constant 0 : index
    %62 = vector.load %arg11[%c0_33, %c1, %c0_34, %c0_35] : memref<1x8x8x8xbf16, #tpu.memory_space<vmem>>, vector<1x1x8x8xbf16>
    %63 = vector.shape_cast %62 : vector<1x1x8x8xbf16> to vector<8x8xbf16>
    %64 = vector.shape_cast %61 : vector<8x8xbf16> to vector<1x1x8x8xbf16>
    tpu.vector_store %arg11[%c0_33, %c1, %c0_34, %c0_35], %64 {strides = array<i32>} : memref<1x8x8x8xbf16, #tpu.memory_space<vmem>>, vector<1x1x8x8xbf16>,
    %65 = arith.truncf %60 : vector<8x8xf32> to vector<8x8xbf16>
    %cst_36 = arith.constant dense<0.000000e+00> : vector<8x64xf32>
    %66 = tpu.matmul %65, %48, %cst_36 {dimension_numbers = #tpu.dot_dimension_numbers<[1], [0], [0], [1], [0, 0, 1, 1], [], []>} : vector<8x8xbf16>, vector<8x64xbf16>, vector<8x64xf32> -> vector<8x64xf32>
    %67 = arith.truncf %66 : vector<8x64xf32> to vector<8x64xbf16>
    %c0_37 = arith.constant 0 : index
    %c64 = arith.constant 64 : index
    %68 = vector.load %arg12[%c0_37, %c64] : memref<8x512xbf16, #tpu.memory_space<vmem>>, vector<8x64xbf16>
    tpu.vector_store %arg12[%c0_37, %c64], %67 {strides = array<i32>} : memref<8x512xbf16, #tpu.memory_space<vmem>>, vector<8x64xbf16>,
    %69 = vector.extract_strided_slice %20 {offsets = [0, 128], sizes = [8, 64], strides = [1, 1]} : vector<8x512xbf16> to vector<8x64xbf16>
    %70 = vector.extract_strided_slice %21 {offsets = [0, 128], sizes = [8, 64], strides = [1, 1]} : vector<8x512xbf16> to vector<8x64xbf16>
    %71 = vector.extract_strided_slice %22 {offsets = [0, 128], sizes = [8, 64], strides = [1, 1]} : vector<8x512xbf16> to vector<8x64xbf16>
    %cst_38 = arith.constant dense<0.000000e+00> : vector<8x8xf32>
    %72 = tpu.matmul %69, %70, %cst_38 {dimension_numbers = #tpu.dot_dimension_numbers<[1], [1], [0], [0], [0, 0, 1, 0], [], []>} : vector<8x64xbf16>, vector<8x64xbf16>, vector<8x8xf32> -> vector<8x8xf32>
    %73 = arith.addf %72, %13 : vector<8x8xf32>
    %cst_39 = arith.constant dense<0xFF800000> : vector<8xf32>
    %74 = vector.multi_reduction <maximumf>, %73, %cst_39 [1] : vector<8x8xf32> to vector<8xf32>
    %75 = vector.shape_cast %74 : vector<8xf32> to vector<8x1xf32>
    %76 = vector.broadcast %75 : vector<8x1xf32> to vector<8x8xf32>
    %77 = arith.subf %73, %76 : vector<8x8xf32>
    %78 = math.exp %77 : vector<8x8xf32>
    %cst_40 = arith.constant dense<0.000000e+00> : vector<8xf32>
    %79 = vector.multi_reduction <add>, %78, %cst_40 [1] : vector<8x8xf32> to vector<8xf32>
    %80 = vector.shape_cast %79 : vector<8xf32> to vector<8x1xf32>
    %81 = tpu.reciprocal %80 {approx = true} : vector<8x1xf32> -> vector<8x1xf32>
    %82 = vector.broadcast %81 : vector<8x1xf32> to vector<8x8xf32>
    %83 = arith.mulf %78, %82 : vector<8x8xf32>
    %84 = arith.truncf %83 : vector<8x8xf32> to vector<8x8xbf16>
    %c0_41 = arith.constant 0 : index
    %c2 = arith.constant 2 : index
    %c0_42 = arith.constant 0 : index
    %c0_43 = arith.constant 0 : index
    %85 = vector.load %arg11[%c0_41, %c2, %c0_42, %c0_43] : memref<1x8x8x8xbf16, #tpu.memory_space<vmem>>, vector<1x1x8x8xbf16>
    %86 = vector.shape_cast %85 : vector<1x1x8x8xbf16> to vector<8x8xbf16>
    %87 = vector.shape_cast %84 : vector<8x8xbf16> to vector<1x1x8x8xbf16>
    tpu.vector_store %arg11[%c0_41, %c2, %c0_42, %c0_43], %87 {strides = array<i32>} : memref<1x8x8x8xbf16, #tpu.memory_space<vmem>>, vector<1x1x8x8xbf16>,
    %88 = arith.truncf %83 : vector<8x8xf32> to vector<8x8xbf16>
    %cst_44 = arith.constant dense<0.000000e+00> : vector<8x64xf32>
    %89 = tpu.matmul %88, %71, %cst_44 {dimension_numbers = #tpu.dot_dimension_numbers<[1], [0], [0], [1], [0, 0, 1, 1], [], []>} : vector<8x8xbf16>, vector<8x64xbf16>, vector<8x64xf32> -> vector<8x64xf32>
    %90 = arith.truncf %89 : vector<8x64xf32> to vector<8x64xbf16>
    %c0_45 = arith.constant 0 : index
    %c128 = arith.constant 128 : index
    %91 = vector.load %arg12[%c0_45, %c128] : memref<8x512xbf16, #tpu.memory_space<vmem>>, vector<8x64xbf16>
    tpu.vector_store %arg12[%c0_45, %c128], %90 {strides = array<i32>} : memref<8x512xbf16, #tpu.memory_space<vmem>>, vector<8x64xbf16>,
    %92 = vector.extract_strided_slice %20 {offsets = [0, 192], sizes = [8, 64], strides = [1, 1]} : vector<8x512xbf16> to vector<8x64xbf16>
    %93 = vector.extract_strided_slice %21 {offsets = [0, 192], sizes = [8, 64], strides = [1, 1]} : vector<8x512xbf16> to vector<8x64xbf16>
    %94 = vector.extract_strided_slice %22 {offsets = [0, 192], sizes = [8, 64], strides = [1, 1]} : vector<8x512xbf16> to vector<8x64xbf16>
    %cst_46 = arith.constant dense<0.000000e+00> : vector<8x8xf32>
    %95 = tpu.matmul %92, %93, %cst_46 {dimension_numbers = #tpu.dot_dimension_numbers<[1], [1], [0], [0], [0, 0, 1, 0], [], []>} : vector<8x64xbf16>, vector<8x64xbf16>, vector<8x8xf32> -> vector<8x8xf32>
    %96 = arith.addf %95, %13 : vector<8x8xf32>
    %cst_47 = arith.constant dense<0xFF800000> : vector<8xf32>
    %97 = vector.multi_reduction <maximumf>, %96, %cst_47 [1] : vector<8x8xf32> to vector<8xf32>
    %98 = vector.shape_cast %97 : vector<8xf32> to vector<8x1xf32>
    %99 = vector.broadcast %98 : vector<8x1xf32> to vector<8x8xf32>
    %100 = arith.subf %96, %99 : vector<8x8xf32>
    %101 = math.exp %100 : vector<8x8xf32>
    %cst_48 = arith.constant dense<0.000000e+00> : vector<8xf32>
    %102 = vector.multi_reduction <add>, %101, %cst_48 [1] : vector<8x8xf32> to vector<8xf32>
    %103 = vector.shape_cast %102 : vector<8xf32> to vector<8x1xf32>
    %104 = tpu.reciprocal %103 {approx = true} : vector<8x1xf32> -> vector<8x1xf32>
    %105 = vector.broadcast %104 : vector<8x1xf32> to vector<8x8xf32>
    %106 = arith.mulf %101, %105 : vector<8x8xf32>
    %107 = arith.truncf %106 : vector<8x8xf32> to vector<8x8xbf16>
    %c0_49 = arith.constant 0 : index
    %c3 = arith.constant 3 : index
    %c0_50 = arith.constant 0 : index
    %c0_51 = arith.constant 0 : index
    %108 = vector.load %arg11[%c0_49, %c3, %c0_50, %c0_51] : memref<1x8x8x8xbf16, #tpu.memory_space<vmem>>, vector<1x1x8x8xbf16>
    %109 = vector.shape_cast %108 : vector<1x1x8x8xbf16> to vector<8x8xbf16>
    %110 = vector.shape_cast %107 : vector<8x8xbf16> to vector<1x1x8x8xbf16>
    tpu.vector_store %arg11[%c0_49, %c3, %c0_50, %c0_51], %110 {strides = array<i32>} : memref<1x8x8x8xbf16, #tpu.memory_space<vmem>>, vector<1x1x8x8xbf16>,
    %111 = arith.truncf %106 : vector<8x8xf32> to vector<8x8xbf16>
    %cst_52 = arith.constant dense<0.000000e+00> : vector<8x64xf32>
    %112 = tpu.matmul %111, %94, %cst_52 {dimension_numbers = #tpu.dot_dimension_numbers<[1], [0], [0], [1], [0, 0, 1, 1], [], []>} : vector<8x8xbf16>, vector<8x64xbf16>, vector<8x64xf32> -> vector<8x64xf32>
    %113 = arith.truncf %112 : vector<8x64xf32> to vector<8x64xbf16>
    %c0_53 = arith.constant 0 : index
    %c192 = arith.constant 192 : index
    %114 = vector.load %arg12[%c0_53, %c192] : memref<8x512xbf16, #tpu.memory_space<vmem>>, vector<8x64xbf16>
    tpu.vector_store %arg12[%c0_53, %c192], %113 {strides = array<i32>} : memref<8x512xbf16, #tpu.memory_space<vmem>>, vector<8x64xbf16>,
    %115 = vector.extract_strided_slice %20 {offsets = [0, 256], sizes = [8, 64], strides = [1, 1]} : vector<8x512xbf16> to vector<8x64xbf16>
    %116 = vector.extract_strided_slice %21 {offsets = [0, 256], sizes = [8, 64], strides = [1, 1]} : vector<8x512xbf16> to vector<8x64xbf16>
    %117 = vector.extract_strided_slice %22 {offsets = [0, 256], sizes = [8, 64], strides = [1, 1]} : vector<8x512xbf16> to vector<8x64xbf16>
    %cst_54 = arith.constant dense<0.000000e+00> : vector<8x8xf32>
    %118 = tpu.matmul %115, %116, %cst_54 {dimension_numbers = #tpu.dot_dimension_numbers<[1], [1], [0], [0], [0, 0, 1, 0], [], []>} : vector<8x64xbf16>, vector<8x64xbf16>, vector<8x8xf32> -> vector<8x8xf32>
    %119 = arith.addf %118, %13 : vector<8x8xf32>
    %cst_55 = arith.constant dense<0xFF800000> : vector<8xf32>
    %120 = vector.multi_reduction <maximumf>, %119, %cst_55 [1] : vector<8x8xf32> to vector<8xf32>
    %121 = vector.shape_cast %120 : vector<8xf32> to vector<8x1xf32>
    %122 = vector.broadcast %121 : vector<8x1xf32> to vector<8x8xf32>
    %123 = arith.subf %119, %122 : vector<8x8xf32>
    %124 = math.exp %123 : vector<8x8xf32>
    %cst_56 = arith.constant dense<0.000000e+00> : vector<8xf32>
    %125 = vector.multi_reduction <add>, %124, %cst_56 [1] : vector<8x8xf32> to vector<8xf32>
    %126 = vector.shape_cast %125 : vector<8xf32> to vector<8x1xf32>
    %127 = tpu.reciprocal %126 {approx = true} : vector<8x1xf32> -> vector<8x1xf32>
    %128 = vector.broadcast %127 : vector<8x1xf32> to vector<8x8xf32>
    %129 = arith.mulf %124, %128 : vector<8x8xf32>
    %130 = arith.truncf %129 : vector<8x8xf32> to vector<8x8xbf16>
    %c0_57 = arith.constant 0 : index
    %c4 = arith.constant 4 : index
    %c0_58 = arith.constant 0 : index
    %c0_59 = arith.constant 0 : index
    %131 = vector.load %arg11[%c0_57, %c4, %c0_58, %c0_59] : memref<1x8x8x8xbf16, #tpu.memory_space<vmem>>, vector<1x1x8x8xbf16>
    %132 = vector.shape_cast %131 : vector<1x1x8x8xbf16> to vector<8x8xbf16>
    %133 = vector.shape_cast %130 : vector<8x8xbf16> to vector<1x1x8x8xbf16>
    tpu.vector_store %arg11[%c0_57, %c4, %c0_58, %c0_59], %133 {strides = array<i32>} : memref<1x8x8x8xbf16, #tpu.memory_space<vmem>>, vector<1x1x8x8xbf16>,
    %134 = arith.truncf %129 : vector<8x8xf32> to vector<8x8xbf16>
    %cst_60 = arith.constant dense<0.000000e+00> : vector<8x64xf32>
    %135 = tpu.matmul %134, %117, %cst_60 {dimension_numbers = #tpu.dot_dimension_numbers<[1], [0], [0], [1], [0, 0, 1, 1], [], []>} : vector<8x8xbf16>, vector<8x64xbf16>, vector<8x64xf32> -> vector<8x64xf32>
    %136 = arith.truncf %135 : vector<8x64xf32> to vector<8x64xbf16>
    %c0_61 = arith.constant 0 : index
    %c256 = arith.constant 256 : index
    %137 = vector.load %arg12[%c0_61, %c256] : memref<8x512xbf16, #tpu.memory_space<vmem>>, vector<8x64xbf16>
    tpu.vector_store %arg12[%c0_61, %c256], %136 {strides = array<i32>} : memref<8x512xbf16, #tpu.memory_space<vmem>>, vector<8x64xbf16>,
    %138 = vector.extract_strided_slice %20 {offsets = [0, 320], sizes = [8, 64], strides = [1, 1]} : vector<8x512xbf16> to vector<8x64xbf16>
    %139 = vector.extract_strided_slice %21 {offsets = [0, 320], sizes = [8, 64], strides = [1, 1]} : vector<8x512xbf16> to vector<8x64xbf16>
    %140 = vector.extract_strided_slice %22 {offsets = [0, 320], sizes = [8, 64], strides = [1, 1]} : vector<8x512xbf16> to vector<8x64xbf16>
    %cst_62 = arith.constant dense<0.000000e+00> : vector<8x8xf32>
    %141 = tpu.matmul %138, %139, %cst_62 {dimension_numbers = #tpu.dot_dimension_numbers<[1], [1], [0], [0], [0, 0, 1, 0], [], []>} : vector<8x64xbf16>, vector<8x64xbf16>, vector<8x8xf32> -> vector<8x8xf32>
    %142 = arith.addf %141, %13 : vector<8x8xf32>
    %cst_63 = arith.constant dense<0xFF800000> : vector<8xf32>
    %143 = vector.multi_reduction <maximumf>, %142, %cst_63 [1] : vector<8x8xf32> to vector<8xf32>
    %144 = vector.shape_cast %143 : vector<8xf32> to vector<8x1xf32>
    %145 = vector.broadcast %144 : vector<8x1xf32> to vector<8x8xf32>
    %146 = arith.subf %142, %145 : vector<8x8xf32>
    %147 = math.exp %146 : vector<8x8xf32>
    %cst_64 = arith.constant dense<0.000000e+00> : vector<8xf32>
    %148 = vector.multi_reduction <add>, %147, %cst_64 [1] : vector<8x8xf32> to vector<8xf32>
    %149 = vector.shape_cast %148 : vector<8xf32> to vector<8x1xf32>
    %150 = tpu.reciprocal %149 {approx = true} : vector<8x1xf32> -> vector<8x1xf32>
    %151 = vector.broadcast %150 : vector<8x1xf32> to vector<8x8xf32>
    %152 = arith.mulf %147, %151 : vector<8x8xf32>
    %153 = arith.truncf %152 : vector<8x8xf32> to vector<8x8xbf16>
    %c0_65 = arith.constant 0 : index
    %c5 = arith.constant 5 : index
    %c0_66 = arith.constant 0 : index
    %c0_67 = arith.constant 0 : index
    %154 = vector.load %arg11[%c0_65, %c5, %c0_66, %c0_67] : memref<1x8x8x8xbf16, #tpu.memory_space<vmem>>, vector<1x1x8x8xbf16>
    %155 = vector.shape_cast %154 : vector<1x1x8x8xbf16> to vector<8x8xbf16>
    %156 = vector.shape_cast %153 : vector<8x8xbf16> to vector<1x1x8x8xbf16>
    tpu.vector_store %arg11[%c0_65, %c5, %c0_66, %c0_67], %156 {strides = array<i32>} : memref<1x8x8x8xbf16, #tpu.memory_space<vmem>>, vector<1x1x8x8xbf16>,
    %157 = arith.truncf %152 : vector<8x8xf32> to vector<8x8xbf16>
    %cst_68 = arith.constant dense<0.000000e+00> : vector<8x64xf32>
    %158 = tpu.matmul %157, %140, %cst_68 {dimension_numbers = #tpu.dot_dimension_numbers<[1], [0], [0], [1], [0, 0, 1, 1], [], []>} : vector<8x8xbf16>, vector<8x64xbf16>, vector<8x64xf32> -> vector<8x64xf32>
    %159 = arith.truncf %158 : vector<8x64xf32> to vector<8x64xbf16>
    %c0_69 = arith.constant 0 : index
    %c320 = arith.constant 320 : index
    %160 = vector.load %arg12[%c0_69, %c320] : memref<8x512xbf16, #tpu.memory_space<vmem>>, vector<8x64xbf16>
    tpu.vector_store %arg12[%c0_69, %c320], %159 {strides = array<i32>} : memref<8x512xbf16, #tpu.memory_space<vmem>>, vector<8x64xbf16>,
    %161 = vector.extract_strided_slice %20 {offsets = [0, 384], sizes = [8, 64], strides = [1, 1]} : vector<8x512xbf16> to vector<8x64xbf16>
    %162 = vector.extract_strided_slice %21 {offsets = [0, 384], sizes = [8, 64], strides = [1, 1]} : vector<8x512xbf16> to vector<8x64xbf16>
    %163 = vector.extract_strided_slice %22 {offsets = [0, 384], sizes = [8, 64], strides = [1, 1]} : vector<8x512xbf16> to vector<8x64xbf16>
    %cst_70 = arith.constant dense<0.000000e+00> : vector<8x8xf32>
    %164 = tpu.matmul %161, %162, %cst_70 {dimension_numbers = #tpu.dot_dimension_numbers<[1], [1], [0], [0], [0, 0, 1, 0], [], []>} : vector<8x64xbf16>, vector<8x64xbf16>, vector<8x8xf32> -> vector<8x8xf32>
    %165 = arith.addf %164, %13 : vector<8x8xf32>
    %cst_71 = arith.constant dense<0xFF800000> : vector<8xf32>
    %166 = vector.multi_reduction <maximumf>, %165, %cst_71 [1] : vector<8x8xf32> to vector<8xf32>
    %167 = vector.shape_cast %166 : vector<8xf32> to vector<8x1xf32>
    %168 = vector.broadcast %167 : vector<8x1xf32> to vector<8x8xf32>
    %169 = arith.subf %165, %168 : vector<8x8xf32>
    %170 = math.exp %169 : vector<8x8xf32>
    %cst_72 = arith.constant dense<0.000000e+00> : vector<8xf32>
    %171 = vector.multi_reduction <add>, %170, %cst_72 [1] : vector<8x8xf32> to vector<8xf32>
    %172 = vector.shape_cast %171 : vector<8xf32> to vector<8x1xf32>
    %173 = tpu.reciprocal %172 {approx = true} : vector<8x1xf32> -> vector<8x1xf32>
    %174 = vector.broadcast %173 : vector<8x1xf32> to vector<8x8xf32>
    %175 = arith.mulf %170, %174 : vector<8x8xf32>
    %176 = arith.truncf %175 : vector<8x8xf32> to vector<8x8xbf16>
    %c0_73 = arith.constant 0 : index
    %c6 = arith.constant 6 : index
    %c0_74 = arith.constant 0 : index
    %c0_75 = arith.constant 0 : index
    %177 = vector.load %arg11[%c0_73, %c6, %c0_74, %c0_75] : memref<1x8x8x8xbf16, #tpu.memory_space<vmem>>, vector<1x1x8x8xbf16>
    %178 = vector.shape_cast %177 : vector<1x1x8x8xbf16> to vector<8x8xbf16>
    %179 = vector.shape_cast %176 : vector<8x8xbf16> to vector<1x1x8x8xbf16>
    tpu.vector_store %arg11[%c0_73, %c6, %c0_74, %c0_75], %179 {strides = array<i32>} : memref<1x8x8x8xbf16, #tpu.memory_space<vmem>>, vector<1x1x8x8xbf16>,
    %180 = arith.truncf %175 : vector<8x8xf32> to vector<8x8xbf16>
    %cst_76 = arith.constant dense<0.000000e+00> : vector<8x64xf32>
    %181 = tpu.matmul %180, %163, %cst_76 {dimension_numbers = #tpu.dot_dimension_numbers<[1], [0], [0], [1], [0, 0, 1, 1], [], []>} : vector<8x8xbf16>, vector<8x64xbf16>, vector<8x64xf32> -> vector<8x64xf32>
    %182 = arith.truncf %181 : vector<8x64xf32> to vector<8x64xbf16>
    %c0_77 = arith.constant 0 : index
    %c384 = arith.constant 384 : index
    %183 = vector.load %arg12[%c0_77, %c384] : memref<8x512xbf16, #tpu.memory_space<vmem>>, vector<8x64xbf16>
    tpu.vector_store %arg12[%c0_77, %c384], %182 {strides = array<i32>} : memref<8x512xbf16, #tpu.memory_space<vmem>>, vector<8x64xbf16>,
    %184 = vector.extract_strided_slice %20 {offsets = [0, 448], sizes = [8, 64], strides = [1, 1]} : vector<8x512xbf16> to vector<8x64xbf16>
    %185 = vector.extract_strided_slice %21 {offsets = [0, 448], sizes = [8, 64], strides = [1, 1]} : vector<8x512xbf16> to vector<8x64xbf16>
    %186 = vector.extract_strided_slice %22 {offsets = [0, 448], sizes = [8, 64], strides = [1, 1]} : vector<8x512xbf16> to vector<8x64xbf16>
    %cst_78 = arith.constant dense<0.000000e+00> : vector<8x8xf32>
    %187 = tpu.matmul %184, %185, %cst_78 {dimension_numbers = #tpu.dot_dimension_numbers<[1], [1], [0], [0], [0, 0, 1, 0], [], []>} : vector<8x64xbf16>, vector<8x64xbf16>, vector<8x8xf32> -> vector<8x8xf32>
    %188 = arith.addf %187, %13 : vector<8x8xf32>
    %cst_79 = arith.constant dense<0xFF800000> : vector<8xf32>
    %189 = vector.multi_reduction <maximumf>, %188, %cst_79 [1] : vector<8x8xf32> to vector<8xf32>
    %190 = vector.shape_cast %189 : vector<8xf32> to vector<8x1xf32>
    %191 = vector.broadcast %190 : vector<8x1xf32> to vector<8x8xf32>
    %192 = arith.subf %188, %191 : vector<8x8xf32>
    %193 = math.exp %192 : vector<8x8xf32>
    %cst_80 = arith.constant dense<0.000000e+00> : vector<8xf32>
    %194 = vector.multi_reduction <add>, %193, %cst_80 [1] : vector<8x8xf32> to vector<8xf32>
    %195 = vector.shape_cast %194 : vector<8xf32> to vector<8x1xf32>
    %196 = tpu.reciprocal %195 {approx = true} : vector<8x1xf32> -> vector<8x1xf32>
    %197 = vector.broadcast %196 : vector<8x1xf32> to vector<8x8xf32>
    %198 = arith.mulf %193, %197 : vector<8x8xf32>
    %199 = arith.truncf %198 : vector<8x8xf32> to vector<8x8xbf16>
    %c0_81 = arith.constant 0 : index
    %c7 = arith.constant 7 : index
    %c0_82 = arith.constant 0 : index
    %c0_83 = arith.constant 0 : index
    %200 = vector.load %arg11[%c0_81, %c7, %c0_82, %c0_83] : memref<1x8x8x8xbf16, #tpu.memory_space<vmem>>, vector<1x1x8x8xbf16>
    %201 = vector.shape_cast %200 : vector<1x1x8x8xbf16> to vector<8x8xbf16>
    %202 = vector.shape_cast %199 : vector<8x8xbf16> to vector<1x1x8x8xbf16>
    tpu.vector_store %arg11[%c0_81, %c7, %c0_82, %c0_83], %202 {strides = array<i32>} : memref<1x8x8x8xbf16, #tpu.memory_space<vmem>>, vector<1x1x8x8xbf16>,
    %203 = arith.truncf %198 : vector<8x8xf32> to vector<8x8xbf16>
    %cst_84 = arith.constant dense<0.000000e+00> : vector<8x64xf32>
    %204 = tpu.matmul %203, %186, %cst_84 {dimension_numbers = #tpu.dot_dimension_numbers<[1], [0], [0], [1], [0, 0, 1, 1], [], []>} : vector<8x8xbf16>, vector<8x64xbf16>, vector<8x64xf32> -> vector<8x64xf32>
    %205 = arith.truncf %204 : vector<8x64xf32> to vector<8x64xbf16>
    %c0_85 = arith.constant 0 : index
    %c448 = arith.constant 448 : index
    %206 = vector.load %arg12[%c0_85, %c448] : memref<8x512xbf16, #tpu.memory_space<vmem>>, vector<8x64xbf16>
    tpu.vector_store %arg12[%c0_85, %c448], %205 {strides = array<i32>} : memref<8x512xbf16, #tpu.memory_space<vmem>>, vector<8x64xbf16>,
    %c0_86 = arith.constant 0 : index
    %c0_87 = arith.constant 0 : index
    %207 = vector.load %arg12[%c0_86, %c0_87] : memref<8x512xbf16, #tpu.memory_space<vmem>>, vector<8x512xbf16>
    %c0_88 = arith.constant 0 : index
    %c0_89 = arith.constant 0 : index
    %208 = vector.load %arg9[%c0_88, %c0_89] : memref<512x30xbf16, #tpu.memory_space<vmem>>, vector<512x30xbf16>
    %cst_90 = arith.constant dense<0.000000e+00> : vector<8x30xf32>
    %209 = tpu.matmul %207, %208, %cst_90 {dimension_numbers = #tpu.dot_dimension_numbers<[1], [0], [0], [1], [0, 0, 1, 1], [], []>} : vector<8x512xbf16>, vector<512x30xbf16>, vector<8x30xf32> -> vector<8x30xf32>
    %210 = arith.addf %209, %1 : vector<8x30xf32>
    %cst_91 = arith.constant dense<0.000000e+00> : vector<8xf32>
    %211 = vector.multi_reduction <add>, %210, %cst_91 [1] : vector<8x30xf32> to vector<8xf32>
    %212 = vector.shape_cast %211 : vector<8xf32> to vector<8x1xf32>
    %cst_92 = arith.constant 3.000000e+01 : f32
    %213 = vector.broadcast %cst_92 : f32 to vector<8x1xf32>
    %214 = arith.divf %212, %213 : vector<8x1xf32>
    %215 = vector.broadcast %214 : vector<8x1xf32> to vector<8x30xf32>
    %216 = arith.subf %210, %215 : vector<8x30xf32>
    %217 = arith.mulf %216, %216 : vector<8x30xf32>
    %cst_93 = arith.constant dense<0.000000e+00> : vector<8xf32>
    %218 = vector.multi_reduction <add>, %217, %cst_93 [1] : vector<8x30xf32> to vector<8xf32>
    %219 = vector.shape_cast %218 : vector<8xf32> to vector<8x1xf32>
    %cst_94 = arith.constant 3.000000e+01 : f32
    %220 = vector.broadcast %cst_94 : f32 to vector<8x1xf32>
    %221 = arith.divf %219, %220 : vector<8x1xf32>
    %222 = vector.broadcast %214 : vector<8x1xf32> to vector<8x30xf32>
    %223 = arith.subf %210, %222 : vector<8x30xf32>
    %cst_95 = arith.constant 9.99999974E-6 : f32
    %224 = vector.broadcast %cst_95 : f32 to vector<8x1xf32>
    %225 = arith.addf %221, %224 : vector<8x1xf32>
    %226 = math.rsqrt %225 : vector<8x1xf32>
    %227 = vector.broadcast %226 : vector<8x1xf32> to vector<8x30xf32>
    %228 = arith.mulf %223, %227 : vector<8x30xf32>
    %c0_96 = arith.constant 0 : index
    %c0_97 = arith.constant 0 : index
    %c0_98 = arith.constant 0 : index
    %229 = vector.load %arg10[%c0_96, %c0_97, %c0_98] : memref<1x8x30xf32, #tpu.memory_space<vmem>>, vector<1x8x30xf32>
    %230 = vector.shape_cast %229 : vector<1x8x30xf32> to vector<8x30xf32>
    %231 = vector.shape_cast %228 : vector<8x30xf32> to vector<1x8x30xf32>
    tpu.vector_store %arg10[%c0_96, %c0_97, %c0_98], %231 {strides = array<i32>} : memref<1x8x30xf32, #tpu.memory_space<vmem>>, vector<1x8x30xf32>,
    return
  }
  func.func @transform_0(%arg0: i32, %arg1: i32) -> (i32, i32, i32) {
    %c0_i32 = arith.constant 0 : i32
    %c0_i32_0 = arith.constant 0 : i32
    return %arg0, %arg1, %c0_i32 : i32, i32, i32
  }
  func.func @transform_1(%arg0: i32, %arg1: i32) -> (i32, i32, i32) {
    %c0_i32 = arith.constant 0 : i32
    %c0_i32_0 = arith.constant 0 : i32
    %c0_i32_1 = arith.constant 0 : i32
    return %arg0, %c0_i32, %c0_i32_0 : i32, i32, i32
  }
  func.func @transform_2(%arg0: i32, %arg1: i32) -> (i32, i32, i32) {
    %c0_i32 = arith.constant 0 : i32
    %c0_i32_0 = arith.constant 0 : i32
    %c0_i32_1 = arith.constant 0 : i32
    return %arg0, %c0_i32, %c0_i32_0 : i32, i32, i32
  }
  func.func @transform_3(%arg0: i32, %arg1: i32) -> (i32, i32, i32) {
    %c0_i32 = arith.constant 0 : i32
    %c0_i32_0 = arith.constant 0 : i32
    return %arg0, %arg1, %c0_i32 : i32, i32, i32
  }
  func.func @transform_4(%arg0: i32, %arg1: i32) -> (i32, i32) {
    %c0_i32 = arith.constant 0 : i32
    %c0_i32_0 = arith.constant 0 : i32
    %c0_i32_1 = arith.constant 0 : i32
    return %c0_i32, %c0_i32_0 : i32, i32
  }
  func.func @transform_5(%arg0: i32, %arg1: i32) -> (i32, i32) {
    %c0_i32 = arith.constant 0 : i32
    %c0_i32_0 = arith.constant 0 : i32
    %c0_i32_1 = arith.constant 0 : i32
    return %c0_i32, %c0_i32_0 : i32, i32
  }
  func.func @transform_6(%arg0: i32, %arg1: i32) -> (i32, i32) {
    %c0_i32 = arith.constant 0 : i32
    %c0_i32_0 = arith.constant 0 : i32
    %c0_i32_1 = arith.constant 0 : i32
    return %c0_i32, %c0_i32_0 : i32, i32
  }
  func.func @transform_7(%arg0: i32, %arg1: i32) -> (i32, i32) {
    %c0_i32 = arith.constant 0 : i32
    %c0_i32_0 = arith.constant 0 : i32
    %c0_i32_1 = arith.constant 0 : i32
    return %c0_i32, %c0_i32_0 : i32, i32
  }
  func.func @transform_8(%arg0: i32, %arg1: i32) -> (i32, i32, i32) {
    %c0_i32 = arith.constant 0 : i32
    %c0_i32_0 = arith.constant 0 : i32
    return %arg0, %arg1, %c0_i32 : i32, i32, i32
  }
  func.func @transform_9(%arg0: i32, %arg1: i32) -> (i32, i32, i32, i32) {
    %c0_i32 = arith.constant 0 : i32
    %c0_i32_0 = arith.constant 0 : i32
    %c0_i32_1 = arith.constant 0 : i32
    return %arg0, %c0_i32, %arg1, %c0_i32_0 : i32, i32, i32, i32
  }
}

</mosaic_0001>

<llo_original>
// kernel: multi_head_attention.1
$region0: #{multi_head_attention.1}
  #allocation0 [shape = 'u32[]', space=smem, size = 0x4, offset = 0x4, fixed_abs, tag = 'smem constant byte address 0x4 - core index']
  #allocation1 [shape = 'u32[72,128]{1,0:T(1,128)}', space=vmem, size = 0x9000, scoped, tag = 'internal scratch']
  #allocation2 [shape = 'bf16[8,512]{1,0:T(8,128)(2,1)}', space=vmem, size = 0x2000, scoped, tag = 'scratch operand']
  %s0 = inlined_call_operand.vmem [shape: f32[2,8,30], index: 0, kind: input, shape index: {}]
  %s1 = inlined_call_operand.vmem [shape: f32[2,8,30], index: 1, kind: input, shape index: {}]
  %s2 = inlined_call_operand.vmem [shape: f32[2,8,30], index: 2, kind: input, shape index: {}]
  %s3 = inlined_call_operand.vmem [shape: bf16[2,8,8], index: 3, kind: input, shape index: {}]
  %s4 = inlined_call_operand.vmem [shape: bf16[30,512], index: 4, kind: input, shape index: {}]
  %s5 = inlined_call_operand.vmem [shape: bf16[30,512], index: 5, kind: input, shape index: {}]
  %s6 = inlined_call_operand.vmem [shape: bf16[30,512], index: 6, kind: input, shape index: {}]
  %s7 = inlined_call_operand.vmem [shape: bf16[512,30], index: 7, kind: input, shape index: {}]
  %s8 = inlined_call_operand.hbm [shape: f32[2,8,30], index: 8, kind: output, shape index: {0}]
  %s9 = inlined_call_operand.hbm [shape: bf16[2,8,8,8], index: 9, kind: output, shape index: {1}]
  %10 = xla_tuple %s8, %s9
  %s11 = sld [smem:[#allocation0]]
  $region73: #{multi_head_attention.1} parent=0
    _
  %s13 = ssub.s32 1, %s11
  %s14 = scalar_select 0, %s13, %s11
  $region1: #{multi_head_attention.1} parent=0
    #allocation3 [shape = 'u8[8192]{0}', space=vmem, size = 0x2000, scoped, tag = 'output window, operand 0']
    #allocation4 [shape = 's32[2]{0}', space=sflag, size = 0x8, scoped, tag = 'scoped memory for multi_head_attention.1']
    #allocation5 [shape = 'u8[32768]{0}', space=vmem, size = 0x8000, scoped, tag = 'output window, operand 1']
    #allocation6 [shape = 's32[2]{0}', space=sflag, size = 0x8, scoped, tag = 'scoped memory for multi_head_attention.1']
    %15 = vsyncpa [#allocation4], 0
    %s16 = scalar_lea.sflag [#allocation4], 1
    %17 = vsyncpa %s16, 0
    %18 = vsyncpa [#allocation6], 0
    %s19 = scalar_lea.sflag [#allocation6], 1
    %20 = vsyncpa %s19, 0
    loop: start=0, step=1, limit=4
    $region2: #{multi_head_attention.1} parent=1 // loop_pre_header
      _
    $region3: #{multi_head_attention.1} parent=1 // loop_header
      %s22 = sphi 0, %s26
      %p23 = scmp.ge.s32.totalorder %s22, 4
      %s29 = sphi 0, %s41
      %s30 = sphi 0, %s37
      %s31 = sphi 0, %s29
      %s32 = sphi 0, %s30
      %s33 = sphi 0, %s31
      %s34 = sphi 0, %s32
      %s46 = sphi 0, %s48
      %s49 = sphi 0, %s46
      %s50 = sphi 0, %s49
      %s66 = sphi 0, %s50
      %s72 = sphi 0, %s74
      %s75 = sphi 0, %s72
      %s76 = sphi 0, %s75
      %s92 = sphi 0, %s76
      %s98 = sphi 0, %s100
      %s101 = sphi 0, %s98
      %s102 = sphi 0, %s101
      %s118 = sphi 0, %s102
      %s126 = sphi 0, %s128
      %s129 = sphi 0, %s126
      %s130 = sphi 0, %s129
      %s146 = sphi 0, %s130
      %s150 = sphi 0, %s150
      %s152 = sphi 0, %s150
      %s153 = sphi 0, %s152
      %s167 = sphi 0, %s153
      %s171 = sphi 0, %s171
      %s173 = sphi 0, %s171
      %s174 = sphi 0, %s173
      %s188 = sphi 0, %s174
      %s192 = sphi 0, %s192
      %s194 = sphi 0, %s192
      %s195 = sphi 0, %s194
      %s209 = sphi 0, %s195
      %s213 = sphi 0, %s213
      %s215 = sphi 0, %s213
      %s216 = sphi 0, %s215
      %s230 = sphi 0, %s216
      %s238 = sphi 0, %s240
      %s241 = sphi 0, %s238
      %s242 = sphi 0, %s241
      %s258 = sphi 0, %s242
      %s266 = sphi 0, %s268
      %s269 = sphi 0, %s266
      %s270 = sphi 0, %s269
      %s286 = sphi 0, %s270
    $region4: #{multi_head_attention.1} parent=1 // loop_header_branch
      %25 = sbr.rel (%p23) target = $region8
    $region5: #{multi_head_attention.1} parent=1 // loop_body
      %s27 = ssub.s32 %s22, 1
      %s28 = ssub.s32 %s22, 2
      %s35 = sadd.s32 1, %s30
      %p36 = scmp.ge.s32.totalorder %s35, 1
      %s37 = scalar_select %p36, 0, %s35
      %s38 = sadd.s32 1, %s29
      %s39 = scalar_select %p36, %s38, %s29
      %p40 = scmp.ge.s32.totalorder %s39, 2
      %s41 = scalar_select %p40, 0, %s39
      %s42 = ssub.s32 %s29, %s41
      %s43 = ssub.s32 %s30, %s37
      %s44 = sor.u32 %s42, %s43
      %p45 = scmp.eq.s32.totalorder %s44, 0
      %s47 = sadd.s32 %s46, 1
      %s48 = scalar_select %p45, %s46, %s47
      %p51 = pneg %p45
      %p52 = scmp.eq.s32.totalorder %s22, 1
      %p53 = por %p51, %p52
      %p54 = scmp.ne.s32.totalorder %s46, %s49
      %p55 = scmp.eq.s32.totalorder %s22, 0
      %p56 = por %p54, %p55
      %p57 = scmp.ne.s32.totalorder %s46, %s49
      %p58 = scmp.eq.s32.totalorder %s27, 1
      %p59 = por %p57, %p58
      %p60 = scmp.ne.s32.totalorder %s49, %s50
      %p61 = scmp.eq.s32.totalorder %s27, 0
      %p62 = por %p60, %p61
      %p63 = scmp.ne.s32.totalorder %s49, %s50
      %p64 = scmp.eq.s32.totalorder %s28, 1
      %p65 = por %p63, %p64
      %p67 = scmp.ne.s32.totalorder %s50, %s66
      %p68 = scmp.eq.s32.totalorder %s28, 0
      %p69 = por %p67, %p68
      %s70 = ssub.s32 %s29, %s41
      %p71 = scmp.eq.s32.totalorder %s70, 0
      %s73 = sadd.s32 %s72, 1
      %s74 = scalar_select %p71, %s72, %s73
      %p77 = pneg %p71
      %p78 = scmp.eq.s32.totalorder %s22, 1
      %p79 = por %p77, %p78
      %p80 = scmp.ne.s32.totalorder %s72, %s75
      %p81 = scmp.eq.s32.totalorder %s22, 0
      %p82 = por %p80, %p81
      %p83 = scmp.ne.s32.totalorder %s72, %s75
      %p84 = scmp.eq.s32.totalorder %s27, 1
      %p85 = por %p83, %p84
      %p86 = scmp.ne.s32.totalorder %s75, %s76
      %p87 = scmp.eq.s32.totalorder %s27, 0
      %p88 = por %p86, %p87
      %p89 = scmp.ne.s32.totalorder %s75, %s76
      %p90 = scmp.eq.s32.totalorder %s28, 1
      %p91 = por %p89, %p90
      %p93 = scmp.ne.s32.totalorder %s76, %s92
      %p94 = scmp.eq.s32.totalorder %s28, 0
      %p95 = por %p93, %p94
      %s96 = ssub.s32 %s29, %s41
      %p97 = scmp.eq.s32.totalorder %s96, 0
      %s99 = sadd.s32 %s98, 1
      %s100 = scalar_select %p97, %s98, %s99
      %p103 = pneg %p97
      %p104 = scmp.eq.s32.totalorder %s22, 1
      %p105 = por %p103, %p104
      %p106 = scmp.ne.s32.totalorder %s98, %s101
      %p107 = scmp.eq.s32.totalorder %s22, 0
      %p108 = por %p106, %p107
      %p109 = scmp.ne.s32.totalorder %s98, %s101
      %p110 = scmp.eq.s32.totalorder %s27, 1
      %p111 = por %p109, %p110
      %p112 = scmp.ne.s32.totalorder %s101, %s102
      %p113 = scmp.eq.s32.totalorder %s27, 0
      %p114 = por %p112, %p113
      %p115 = scmp.ne.s32.totalorder %s101, %s102
      %p116 = scmp.eq.s32.totalorder %s28, 1
      %p117 = por %p115, %p116
      %p119 = scmp.ne.s32.totalorder %s102, %s118
      %p120 = scmp.eq.s32.totalorder %s28, 0
      %p121 = por %p119, %p120
      %s122 = ssub.s32 %s29, %s41
      %s123 = ssub.s32 %s30, %s37
      %s124 = sor.u32 %s122, %s123
      %p125 = scmp.eq.s32.totalorder %s124, 0
      %s127 = sadd.s32 %s126, 1
      %s128 = scalar_select %p125, %s126, %s127
      %p131 = pneg %p125
      %p132 = scmp.eq.s32.totalorder %s22, 1
      %p133 = por %p131, %p132
      %p134 = scmp.ne.s32.totalorder %s126, %s129
      %p135 = scmp.eq.s32.totalorder %s22, 0
      %p136 = por %p134, %p135
      %p137 = scmp.ne.s32.totalorder %s126, %s129
      %p138 = scmp.eq.s32.totalorder %s27, 1
      %p139 = por %p137, %p138
      %p140 = scmp.ne.s32.totalorder %s129, %s130
      %p141 = scmp.eq.s32.totalorder %s27, 0
      %p142 = por %p140, %p141
      %p143 = scmp.ne.s32.totalorder %s129, %s130
      %p144 = scmp.eq.s32.totalorder %s28, 1
      %p145 = por %p143, %p144
      %p147 = scmp.ne.s32.totalorder %s130, %s146
      %p148 = scmp.eq.s32.totalorder %s28, 0
      %p149 = por %p147, %p148
      %s151 = sadd.s32 %s150, 1
      %p154 = scmp.eq.s32.totalorder %s22, 1
      %p155 = scmp.ne.s32.totalorder %s150, %s152
      %p156 = scmp.eq.s32.totalorder %s22, 0
      %p157 = por %p155, %p156
      %p158 = scmp.ne.s32.totalorder %s150, %s152
      %p159 = scmp.eq.s32.totalorder %s27, 1
      %p160 = por %p158, %p159
      %p161 = scmp.ne.s32.totalorder %s152, %s153
      %p162 = scmp.eq.s32.totalorder %s27, 0
      %p163 = por %p161, %p162
      %p164 = scmp.ne.s32.totalorder %s152, %s153
      %p165 = scmp.eq.s32.totalorder %s28, 1
      %p166 = por %p164, %p165
      %p168 = scmp.ne.s32.totalorder %s153, %s167
      %p169 = scmp.eq.s32.totalorder %s28, 0
      %p170 = por %p168, %p169
      %s172 = sadd.s32 %s171, 1
      %p175 = scmp.eq.s32.totalorder %s22, 1
      %p176 = scmp.ne.s32.totalorder %s171, %s173
      %p177 = scmp.eq.s32.totalorder %s22, 0
      %p178 = por %p176, %p177
      %p179 = scmp.ne.s32.totalorder %s171, %s173
      %p180 = scmp.eq.s32.totalorder %s27, 1
      %p181 = por %p179, %p180
      %p182 = scmp.ne.s32.totalorder %s173, %s174
      %p183 = scmp.eq.s32.totalorder %s27, 0
      %p184 = por %p182, %p183
      %p185 = scmp.ne.s32.totalorder %s173, %s174
      %p186 = scmp.eq.s32.totalorder %s28, 1
      %p187 = por %p185, %p186
      %p189 = scmp.ne.s32.totalorder %s174, %s188
      %p190 = scmp.eq.s32.totalorder %s28, 0
      %p191 = por %p189, %p190
      %s193 = sadd.s32 %s192, 1
      %p196 = scmp.eq.s32.totalorder %s22, 1
      %p197 = scmp.ne.s32.totalorder %s192, %s194
      %p198 = scmp.eq.s32.totalorder %s22, 0
      %p199 = por %p197, %p198
      %p200 = scmp.ne.s32.totalorder %s192, %s194
      %p201 = scmp.eq.s32.totalorder %s27, 1
      %p202 = por %p200, %p201
      %p203 = scmp.ne.s32.totalorder %s194, %s195
      %p204 = scmp.eq.s32.totalorder %s27, 0
      %p205 = por %p203, %p204
      %p206 = scmp.ne.s32.totalorder %s194, %s195
      %p207 = scmp.eq.s32.totalorder %s28, 1
      %p208 = por %p206, %p207
      %p210 = scmp.ne.s32.totalorder %s195, %s209
      %p211 = scmp.eq.s32.totalorder %s28, 0
      %p212 = por %p210, %p211
      %s214 = sadd.s32 %s213, 1
      %p217 = scmp.eq.s32.totalorder %s22, 1
      %p218 = scmp.ne.s32.totalorder %s213, %s215
      %p219 = scmp.eq.s32.totalorder %s22, 0
      %p220 = por %p218, %p219
      %p221 = scmp.ne.s32.totalorder %s213, %s215
      %p222 = scmp.eq.s32.totalorder %s27, 1
      %p223 = por %p221, %p222
      %p224 = scmp.ne.s32.totalorder %s215, %s216
      %p225 = scmp.eq.s32.totalorder %s27, 0
      %p226 = por %p224, %p225
      %p227 = scmp.ne.s32.totalorder %s215, %s216
      %p228 = scmp.eq.s32.totalorder %s28, 1
      %p229 = por %p227, %p228
      %p231 = scmp.ne.s32.totalorder %s216, %s230
      %p232 = scmp.eq.s32.totalorder %s28, 0
      %p233 = por %p231, %p232
      %s234 = ssub.s32 %s29, %s41
      %s235 = ssub.s32 %s30, %s37
      %s236 = sor.u32 %s234, %s235
      %p237 = scmp.eq.s32.totalorder %s236, 0
      %s239 = sadd.s32 %s238, 1
      %s240 = scalar_select %p237, %s238, %s239
      %p243 = pneg %p237
      %p244 = scmp.eq.s32.totalorder %s22, 1
      %p245 = por %p243, %p244
      %p246 = scmp.ne.s32.totalorder %s238, %s241
      %p247 = scmp.eq.s32.totalorder %s22, 0
      %p248 = por %p246, %p247
      %p249 = scmp.ne.s32.totalorder %s238, %s241
      %p250 = scmp.eq.s32.totalorder %s27, 1
      %p251 = por %p249, %p250
      %p252 = scmp.ne.s32.totalorder %s241, %s242
      %p253 = scmp.eq.s32.totalorder %s27, 0
      %p254 = por %p252, %p253
      %p255 = scmp.ne.s32.totalorder %s241, %s242
      %p256 = scmp.eq.s32.totalorder %s28, 1
      %p257 = por %p255, %p256
      %p259 = scmp.ne.s32.totalorder %s242, %s258
      %p260 = scmp.eq.s32.totalorder %s28, 0
      %p261 = por %p259, %p260
      %s262 = ssub.s32 %s29, %s41
      %s263 = ssub.s32 %s30, %s37
      %s264 = sor.u32 %s262, %s263
      %p265 = scmp.eq.s32.totalorder %s264, 0
      %s267 = sadd.s32 %s266, 1
      %s268 = scalar_select %p265, %s266, %s267
      %p271 = pneg %p265
      %p272 = scmp.eq.s32.totalorder %s22, 1
      %p273 = por %p271, %p272
      %p274 = scmp.ne.s32.totalorder %s266, %s269
      %p275 = scmp.eq.s32.totalorder %s22, 0
      %p276 = por %p274, %p275
      %p277 = scmp.ne.s32.totalorder %s266, %s269
      %p278 = scmp.eq.s32.totalorder %s27, 1
      %p279 = por %p277, %p278
      %p280 = scmp.ne.s32.totalorder %s269, %s270
      %p281 = scmp.eq.s32.totalorder %s27, 0
      %p282 = por %p280, %p281
      %p283 = scmp.ne.s32.totalorder %s269, %s270
      %p284 = scmp.eq.s32.totalorder %s28, 1
      %p285 = por %p283, %p284
      %p287 = scmp.ne.s32.totalorder %s270, %s286
      %p288 = scmp.eq.s32.totalorder %s28, 0
      %p289 = por %p287, %p288
      %p290 = scmp.le.s32.totalorder 1, %s22
      %p291 = scmp.lt.s32.totalorder %s22, 3
      %p292 = pnand %p290, %p291
      %p293 = pneg %p292
      // Predicated region
      $region9: #{multi_head_attention.1} parent=5 // pred_check
        _
      $region10: #{multi_head_attention.1} parent=5 // pred_check_branch
        %295 = sbr.rel (%p292) target = $region12
      $region11: #{multi_head_attention.1} parent=5 // pred_region
        %s296 = ssub.s32 %s22, 1
        // Predicated region
        $region13: #{multi_head_attention.1} parent=11 // pred_check
          %p297 = pneg %p163
        $region14: #{multi_head_attention.1} parent=11 // pred_check_branch
          %299 = sbr.rel (%p297) target = $region16
        $region15: #{multi_head_attention.1} parent=11 // pred_region
          _
        $region16: #{multi_head_attention.1} parent=11 // pred_fallthru
          _
        // Predicated region
        $region17: #{multi_head_attention.1} parent=11 // pred_check
          %p300 = pneg %p184
        $region18: #{multi_head_attention.1} parent=11 // pred_check_branch
          %302 = sbr.rel (%p300) target = $region20
        $region19: #{multi_head_attention.1} parent=11 // pred_region
          _
        $region20: #{multi_head_attention.1} parent=11 // pred_fallthru
          _
        // Predicated region
        $region21: #{multi_head_attention.1} parent=11 // pred_check
          %p303 = pneg %p205
        $region22: #{multi_head_attention.1} parent=11 // pred_check_branch
          %305 = sbr.rel (%p303) target = $region24
        $region23: #{multi_head_attention.1} parent=11 // pred_region
          _
        $region24: #{multi_head_attention.1} parent=11 // pred_fallthru
          _
        // Predicated region
        $region25: #{multi_head_attention.1} parent=11 // pred_check
          %p306 = pneg %p226
        $region26: #{multi_head_attention.1} parent=11 // pred_check_branch
          %308 = sbr.rel (%p306) target = $region28
        $region27: #{multi_head_attention.1} parent=11 // pred_region
          _
        $region28: #{multi_head_attention.1} parent=11 // pred_fallthru
          _
      $region12: #{multi_head_attention.1} parent=5 // pred_fallthru
        _
      %p309 = scmp.lt.s32.totalorder %s22, 2
      // Predicated region
      $region29: #{multi_head_attention.1} parent=5 // pred_check
        %p310 = pneg %p309
      $region30: #{multi_head_attention.1} parent=5 // pred_check_branch
        %312 = sbr.rel (%p310) target = $region32
      $region31: #{multi_head_attention.1} parent=5 // pred_region
        // Predicated region
        $region33: #{multi_head_attention.1} parent=31 // pred_check
          %p313 = pneg %p56
        $region34: #{multi_head_attention.1} parent=31 // pred_check_branch
          %315 = sbr.rel (%p313) target = $region36
        $region35: #{multi_head_attention.1} parent=31 // pred_region
          %p316 = scmp.lt.s32.totalorder %s29, 1
          %s317 = scalar_select %p316, %s29, 1
          %p318 = scmp.lt.s32.totalorder %s30, 0
          %s319 = scalar_select %p318, %s30, 0
          %s320 = sadd.s32 %s319, %s317
          %s321 = smul.addr %s320, 8
          %s322 = scalar_lea.vmem %s0, %s321
        $region36: #{multi_head_attention.1} parent=31 // pred_fallthru
          _
        // Predicated region
        $region37: #{multi_head_attention.1} parent=31 // pred_check
          %p323 = pneg %p82
        $region38: #{multi_head_attention.1} parent=31 // pred_check_branch
          %325 = sbr.rel (%p323) target = $region40
        $region39: #{multi_head_attention.1} parent=31 // pred_region
          %p326 = scmp.lt.s32.totalorder %s29, 1
          %s327 = scalar_select %p326, %s29, 1
          %s328 = smul.addr %s327, 8
          %s329 = scalar_lea.vmem %s1, %s328
        $region40: #{multi_head_attention.1} parent=31 // pred_fallthru
          _
        // Predicated region
        $region41: #{multi_head_attention.1} parent=31 // pred_check
          %p330 = pneg %p108
        $region42: #{multi_head_attention.1} parent=31 // pred_check_branch
          %332 = sbr.rel (%p330) target = $region44
        $region43: #{multi_head_attention.1} parent=31 // pred_region
          %p333 = scmp.lt.s32.totalorder %s29, 1
          %s334 = scalar_select %p333, %s29, 1
          %s335 = smul.addr %s334, 8
          %s336 = scalar_lea.vmem %s2, %s335
        $region44: #{multi_head_attention.1} parent=31 // pred_fallthru
          _
        // Predicated region
        $region45: #{multi_head_attention.1} parent=31 // pred_check
          %p337 = pneg %p136
        $region46: #{multi_head_attention.1} parent=31 // pred_check_branch
          %339 = sbr.rel (%p337) target = $region48
        $region47: #{multi_head_attention.1} parent=31 // pred_region
          %p340 = scmp.lt.s32.totalorder %s29, 1
          %s341 = scalar_select %p340, %s29, 1
          %p342 = scmp.lt.s32.totalorder %s30, 0
          %s343 = scalar_select %p342, %s30, 0
          %s344 = sadd.s32 %s343, %s341
          %s345 = smul.addr %s344, 4
          %s346 = scalar_lea.vmem %s3, %s345
        $region48: #{multi_head_attention.1} parent=31 // pred_fallthru
          _
      $region32: #{multi_head_attention.1} parent=5 // pred_fallthru
        _
      %p347 = scmp.le.s32.totalorder 1, %s22
      %p348 = scmp.lt.s32.totalorder %s22, 3
      %p349 = pnand %p347, %p348
      %p350 = pneg %p349
      // Predicated region
      $region49: #{multi_head_attention.1} parent=5 // pred_check
        _
      $region50: #{multi_head_attention.1} parent=5 // pred_check_branch
        %352 = sbr.rel (%p349) target = $region52
      $region51: #{multi_head_attention.1} parent=5 // pred_region
        %s353 = ssub.s32 %s22, 1
        %p354 = scmp.lt.s32.totalorder %s31, 1
        %s355 = scalar_select %p354, %s31, 1
        %p356 = scmp.lt.s32.totalorder %s32, 0
        %s357 = scalar_select %p356, %s32, 0
        %s358 = sadd.s32 %s357, %s355
        %s359 = smul.addr %s358, 8
        %s360 = scalar_lea.vmem %s0, %s359
        %p361 = pneg %p62
        %p362 = pneg %p59
        %p363 = scmp.lt.s32.totalorder %s31, 1
        %s364 = scalar_select %p363, %s31, 1
        %s365 = smul.addr %s364, 8
        %s366 = scalar_lea.vmem %s1, %s365
        %p367 = pneg %p88
        %p368 = pneg %p85
        %p369 = scmp.lt.s32.totalorder %s31, 1
        %s370 = scalar_select %p369, %s31, 1
        %s371 = smul.addr %s370, 8
        %s372 = scalar_lea.vmem %s2, %s371
        %p373 = pneg %p114
        %p374 = pneg %p111
        %p375 = scmp.lt.s32.totalorder %s31, 1
        %s376 = scalar_select %p375, %s31, 1
        %p377 = scmp.lt.s32.totalorder %s32, 0
        %s378 = scalar_select %p377, %s32, 0
        %s379 = sadd.s32 %s378, %s376
        %s380 = smul.addr %s379, 4
        %s381 = scalar_lea.vmem %s3, %s380
        %p382 = pneg %p142
        %p383 = pneg %p139
        %p384 = pneg %p163
        %p385 = pneg %p160
        %p386 = pneg %p184
        %p387 = pneg %p181
        %p388 = pneg %p205
        %p389 = pneg %p202
        %p390 = pneg %p226
        %p391 = pneg %p223
        %p392 = pneg %p254
        %p393 = pneg %p251
        %s394 = sand.u32 %s241, 1
        %s395 = scalar_lea.sflag [#allocation4], %s394
        %s396 = sand.u32 %s241, 1
        %s397 = smul.addr %s396, 8
        %s398 = scalar_lea.vmem [#allocation3], %s397
        %p399 = pneg %p282
        %p400 = pneg %p279
        %s401 = sand.u32 %s269, 1
        %s402 = scalar_lea.sflag [#allocation6], %s401
        %s403 = sand.u32 %s269, 1
        %s404 = smul.addr %s403, 32
        %s405 = scalar_lea.vmem [#allocation5], %s404
        %p406 = scmp.lt.s32.totalorder %s31, 1
        %s407 = scalar_select %p406, %s31, 1
        %p408 = scmp.lt.s32.totalorder %s32, 0
        %s409 = scalar_select %p408, %s32, 0
        %s410 = sadd.s32 %s409, %s407
        %s411 = smul.addr %s410, 8
        %s412 = scalar_lea.vmem %s0, %s411
        %p413 = scmp.lt.s32.totalorder %s31, 1
        %s414 = scalar_select %p413, %s31, 1
        %s415 = smul.addr %s414, 8
        %s416 = scalar_lea.vmem %s1, %s415
        %p417 = scmp.lt.s32.totalorder %s31, 1
        %s418 = scalar_select %p417, %s31, 1
        %s419 = smul.addr %s418, 8
        %s420 = scalar_lea.vmem %s2, %s419
        %p421 = scmp.lt.s32.totalorder %s31, 1
        %s422 = scalar_select %p421, %s31, 1
        %p423 = scmp.lt.s32.totalorder %s32, 0
        %s424 = scalar_select %p423, %s32, 0
        %s425 = sadd.s32 %s424, %s422
        %s426 = smul.addr %s425, 4
        %s427 = scalar_lea.vmem %s3, %s426
        %v429 = vld [vmem:[%s412] sm:$0xff]
        %v430 = vpack.c.bf16 %v429, %v429
        %v431 = vld [vmem:[%s416] sm:$0xff]
        %v432 = vpack.c.bf16 %v431, %v431
        %v433 = vld [vmem:[%s420] sm:$0xff]
        %v434 = vpack.c.bf16 %v433, %v433
        %v435 = vld [vmem:[%s427] sm:$0xf]
        %v436 = vunpack.c.l.bf16 %v435
        %v437 = vmul.f32 %v436, -10000.0
        %v438 = vld [vmem:[%s4] sm:$0xff]
        %v439 = vld [vmem:[%s4 + $0x8] sm:$0xff]
        %v440 = vld [vmem:[%s4 + $0x10] sm:$0xff]
        %v441 = vld [vmem:[%s4 + $0x18] sm:$0xff]
        %v442 = vld [vmem:[%s4 + $0x20] sm:$0xff]
        %v443 = vld [vmem:[%s4 + $0x28] sm:$0xff]
        %v444 = vld [vmem:[%s4 + $0x30] sm:$0x77]
        %v445 = vld [vmem:[%s4 + $0x38] sm:$0x77]
        %v454 = vunpack.c.l.b16 %v438
        %v455 = vunpack.c.h.b16 %v438
        %v456 = vunpack.c.l.b16 %v439
        %v457 = vunpack.c.h.b16 %v439
        %v458 = vunpack.c.l.b16 %v440
        %v459 = vunpack.c.h.b16 %v440
        %v460 = vunpack.c.l.b16 %v441
        %v461 = vunpack.c.h.b16 %v441
        %v462 = vunpack.c.l.b16 %v442
        %v463 = vunpack.c.h.b16 %v442
        %v464 = vunpack.c.l.b16 %v443
        %v465 = vunpack.c.h.b16 %v443
        %v466 = vunpack.c.l.b16 %v444
        %v467 = vunpack.c.h.b16 %v444
        %v468 = vunpack.c.l.b16 %v445
        %v469 = vunpack.c.h.b16 %v445
        %v470 = vpack.c.b16 %v458, %v454
        %v471 = vpack.c.b16 %v459, %v455
        %v472 = vpack.c.b16 %v460, %v456
        %v473 = vpack.c.b16 %v461, %v457
        %v474 = vpack.c.b16 %v466, %v462
        %v475 = vpack.c.b16 %v467, %v463
        %v476 = vpack.c.b16 %v468, %v464
        %v477 = vpack.c.b16 %v469, %v465
        %vm482 = vcmask 244736
        %v484 = vsel %vm482, %v430, 0
        %vm486 = vcmask 1046528
        %v488 = vsel %vm486, %v474, 0
        %v491 = vsel %vm486, %v475, 0
        %v494 = vsel %vm486, %v476, 0
        %v497 = vsel %vm486, %v477, 0
        %499 = vmatpush.bf16.msra.mxu0 0
        %500 = vmatpush.bf16.msra.mxu0 0
        %501 = vmatpush.bf16.msra.mxu0 0
        %502 = vmatpush.bf16.msra.mxu0 0
        %503 = vmatpush.bf16.msra.mxu0 0
        %504 = vmatpush.bf16.msra.mxu0 0
        %505 = vmatpush.bf16.msra.mxu0 %v488
        %506 = vmatpush.bf16.msra.mxu0 %v470
        %507 = vmatmul.bf16.gmra.mxu0 %v484
        %v508 = vpop.f32.mrf.mxu0
        %v509 = vadd.f32 0.0, %v508
        %v510 = vpop.f32.mrf.mxu0
        %511 = vdwg.mxu0
        %512 = vmatpush.bf16.msra.mxu0 0
        %513 = vmatpush.bf16.msra.mxu0 0
        %514 = vmatpush.bf16.msra.mxu0 0
        %515 = vmatpush.bf16.msra.mxu0 0
        %516 = vmatpush.bf16.msra.mxu0 0
        %517 = vmatpush.bf16.msra.mxu0 0
        %518 = vmatpush.bf16.msra.mxu0 %v491
        %519 = vmatpush.bf16.msra.mxu0 %v471
        %520 = vmatmul.bf16.gmra.mxu0 %v484
        %v521 = vpop.f32.mrf.mxu0
        %v522 = vadd.f32 0.0, %v521
        %v523 = vpop.f32.mrf.mxu0
        %524 = vdwg.mxu0
        %525 = vmatpush.bf16.msra.mxu0 0
        %526 = vmatpush.bf16.msra.mxu0 0
        %527 = vmatpush.bf16.msra.mxu0 0
        %528 = vmatpush.bf16.msra.mxu0 0
        %529 = vmatpush.bf16.msra.mxu0 0
        %530 = vmatpush.bf16.msra.mxu0 0
        %531 = vmatpush.bf16.msra.mxu0 %v494
        %532 = vmatpush.bf16.msra.mxu0 %v472
        %533 = vmatmul.bf16.gmra.mxu0 %v484
        %v534 = vpop.f32.mrf.mxu0
        %v535 = vadd.f32 0.0, %v534
        %v536 = vpop.f32.mrf.mxu0
        %537 = vdwg.mxu0
        %538 = vmatpush.bf16.msra.mxu0 0
        %539 = vmatpush.bf16.msra.mxu0 0
        %540 = vmatpush.bf16.msra.mxu0 0
        %541 = vmatpush.bf16.msra.mxu0 0
        %542 = vmatpush.bf16.msra.mxu0 0
        %543 = vmatpush.bf16.msra.mxu0 0
        %544 = vmatpush.bf16.msra.mxu0 %v497
        %545 = vmatpush.bf16.msra.mxu0 %v473
        %546 = vmatmul.bf16.gmra.mxu0 %v484
        %v547 = vpop.f32.mrf.mxu0
        %v548 = vadd.f32 0.0, %v547
        %v549 = vpop.f32.mrf.mxu0
        %550 = vdwg.mxu0
        %v551 = vld [vmem:[%s5] sm:$0xff]
        %v552 = vld [vmem:[%s5 + $0x8] sm:$0xff]
        %v553 = vld [vmem:[%s5 + $0x10] sm:$0xff]
        %v554 = vld [vmem:[%s5 + $0x18] sm:$0xff]
        %v555 = vld [vmem:[%s5 + $0x20] sm:$0xff]
        %v556 = vld [vmem:[%s5 + $0x28] sm:$0xff]
        %v557 = vld [vmem:[%s5 + $0x30] sm:$0x77]
        %v558 = vld [vmem:[%s5 + $0x38] sm:$0x77]
        %v567 = vunpack.c.l.b16 %v551
        %v568 = vunpack.c.h.b16 %v551
        %v569 = vunpack.c.l.b16 %v552
        %v570 = vunpack.c.h.b16 %v552
        %v571 = vunpack.c.l.b16 %v553
        %v572 = vunpack.c.h.b16 %v553
        %v573 = vunpack.c.l.b16 %v554
        %v574 = vunpack.c.h.b16 %v554
        %v575 = vunpack.c.l.b16 %v555
        %v576 = vunpack.c.h.b16 %v555
        %v577 = vunpack.c.l.b16 %v556
        %v578 = vunpack.c.h.b16 %v556
        %v579 = vunpack.c.l.b16 %v557
        %v580 = vunpack.c.h.b16 %v557
        %v581 = vunpack.c.l.b16 %v558
        %v582 = vunpack.c.h.b16 %v558
        %v583 = vpack.c.b16 %v571, %v567
        %v584 = vpack.c.b16 %v572, %v568
        %v585 = vpack.c.b16 %v573, %v569
        %v586 = vpack.c.b16 %v574, %v570
        %v587 = vpack.c.b16 %v579, %v575
        %v588 = vpack.c.b16 %v580, %v576
        %v589 = vpack.c.b16 %v581, %v577
        %v590 = vpack.c.b16 %v582, %v578
        %v596 = vsel %vm482, %v432, 0
        %v599 = vsel %vm486, %v587, 0
        %v602 = vsel %vm486, %v588, 0
        %v605 = vsel %vm486, %v589, 0
        %v608 = vsel %vm486, %v590, 0
        %610 = vmatpush.bf16.msra.mxu0 0
        %611 = vmatpush.bf16.msra.mxu0 0
        %612 = vmatpush.bf16.msra.mxu0 0
        %613 = vmatpush.bf16.msra.mxu0 0
        %614 = vmatpush.bf16.msra.mxu0 0
        %615 = vmatpush.bf16.msra.mxu0 0
        %616 = vmatpush.bf16.msra.mxu0 %v599
        %617 = vmatpush.bf16.msra.mxu0 %v583
        %618 = vmatmul.bf16.gmra.mxu0 %v596
        %v619 = vpop.f32.mrf.mxu0
        %v620 = vadd.f32 0.0, %v619
        %v621 = vpop.f32.mrf.mxu0
        %622 = vdwg.mxu0
        %623 = vmatpush.bf16.msra.mxu0 0
        %624 = vmatpush.bf16.msra.mxu0 0
        %625 = vmatpush.bf16.msra.mxu0 0
        %626 = vmatpush.bf16.msra.mxu0 0
        %627 = vmatpush.bf16.msra.mxu0 0
        %628 = vmatpush.bf16.msra.mxu0 0
        %629 = vmatpush.bf16.msra.mxu0 %v602
        %630 = vmatpush.bf16.msra.mxu0 %v584
        %631 = vmatmul.bf16.gmra.mxu0 %v596
        %v632 = vpop.f32.mrf.mxu0
        %v633 = vadd.f32 0.0, %v632
        %v634 = vpop.f32.mrf.mxu0
        %635 = vdwg.mxu0
        %636 = vmatpush.bf16.msra.mxu0 0
        %637 = vmatpush.bf16.msra.mxu0 0
        %638 = vmatpush.bf16.msra.mxu0 0
        %639 = vmatpush.bf16.msra.mxu0 0
        %640 = vmatpush.bf16.msra.mxu0 0
        %641 = vmatpush.bf16.msra.mxu0 0
        %642 = vmatpush.bf16.msra.mxu0 %v605
        %643 = vmatpush.bf16.msra.mxu0 %v585
        %644 = vmatmul.bf16.gmra.mxu0 %v596
        %v645 = vpop.f32.mrf.mxu0
        %v646 = vadd.f32 0.0, %v645
        %v647 = vpop.f32.mrf.mxu0
        %648 = vdwg.mxu0
        %649 = vmatpush.bf16.msra.mxu0 0
        %650 = vmatpush.bf16.msra.mxu0 0
        %651 = vmatpush.bf16.msra.mxu0 0
        %652 = vmatpush.bf16.msra.mxu0 0
        %653 = vmatpush.bf16.msra.mxu0 0
        %654 = vmatpush.bf16.msra.mxu0 0
        %655 = vmatpush.bf16.msra.mxu0 %v608
        %656 = vmatpush.bf16.msra.mxu0 %v586
        %657 = vmatmul.bf16.gmra.mxu0 %v596
        %v658 = vpop.f32.mrf.mxu0
        %v659 = vadd.f32 0.0, %v658
        %v660 = vpop.f32.mrf.mxu0
        %661 = vdwg.mxu0
        %v662 = vld [vmem:[%s6] sm:$0xff]
        %v663 = vld [vmem:[%s6 + $0x8] sm:$0xff]
        %v664 = vld [vmem:[%s6 + $0x10] sm:$0xff]
        %v665 = vld [vmem:[%s6 + $0x18] sm:$0xff]
        %v666 = vld [vmem:[%s6 + $0x20] sm:$0xff]
        %v667 = vld [vmem:[%s6 + $0x28] sm:$0xff]
        %v668 = vld [vmem:[%s6 + $0x30] sm:$0x77]
        %v669 = vld [vmem:[%s6 + $0x38] sm:$0x77]
        %v678 = vunpack.c.l.b16 %v662
        %v679 = vunpack.c.h.b16 %v662
        %v680 = vunpack.c.l.b16 %v663
        %v681 = vunpack.c.h.b16 %v663
        %v682 = vunpack.c.l.b16 %v664
        %v683 = vunpack.c.h.b16 %v664
        %v684 = vunpack.c.l.b16 %v665
        %v685 = vunpack.c.h.b16 %v665
        %v686 = vunpack.c.l.b16 %v666
        %v687 = vunpack.c.h.b16 %v666
        %v688 = vunpack.c.l.b16 %v667
        %v689 = vunpack.c.h.b16 %v667
        %v690 = vunpack.c.l.b16 %v668
        %v691 = vunpack.c.h.b16 %v668
        %v692 = vunpack.c.l.b16 %v669
        %v693 = vunpack.c.h.b16 %v669
        %v694 = vpack.c.b16 %v682, %v678
        %v695 = vpack.c.b16 %v683, %v679
        %v696 = vpack.c.b16 %v684, %v680
        %v697 = vpack.c.b16 %v685, %v681
        %v698 = vpack.c.b16 %v690, %v686
        %v699 = vpack.c.b16 %v691, %v687
        %v700 = vpack.c.b16 %v692, %v688
        %v701 = vpack.c.b16 %v693, %v689
        %v707 = vsel %vm482, %v434, 0
        %v710 = vsel %vm486, %v698, 0
        %v713 = vsel %vm486, %v699, 0
        %v716 = vsel %vm486, %v700, 0
        %v719 = vsel %vm486, %v701, 0
        %721 = vmatpush.bf16.msra.mxu0 0
        %722 = vmatpush.bf16.msra.mxu0 0
        %723 = vmatpush.bf16.msra.mxu0 0
        %724 = vmatpush.bf16.msra.mxu0 0
        %725 = vmatpush.bf16.msra.mxu0 0
        %726 = vmatpush.bf16.msra.mxu0 0
        %727 = vmatpush.bf16.msra.mxu0 %v710
        %728 = vmatpush.bf16.msra.mxu0 %v694
        %729 = vmatmul.bf16.gmra.mxu0 %v707
        %v730 = vpop.f32.mrf.mxu0
        %v731 = vadd.f32 0.0, %v730
        %v732 = vpop.f32.mrf.mxu0
        %733 = vdwg.mxu0
        %734 = vmatpush.bf16.msra.mxu0 0
        %735 = vmatpush.bf16.msra.mxu0 0
        %736 = vmatpush.bf16.msra.mxu0 0
        %737 = vmatpush.bf16.msra.mxu0 0
        %738 = vmatpush.bf16.msra.mxu0 0
        %739 = vmatpush.bf16.msra.mxu0 0
        %740 = vmatpush.bf16.msra.mxu0 %v713
        %741 = vmatpush.bf16.msra.mxu0 %v695
        %742 = vmatmul.bf16.gmra.mxu0 %v707
        %v743 = vpop.f32.mrf.mxu0
        %v744 = vadd.f32 0.0, %v743
        %v745 = vpop.f32.mrf.mxu0
        %746 = vdwg.mxu0
        %747 = vmatpush.bf16.msra.mxu0 0
        %748 = vmatpush.bf16.msra.mxu0 0
        %749 = vmatpush.bf16.msra.mxu0 0
        %750 = vmatpush.bf16.msra.mxu0 0
        %751 = vmatpush.bf16.msra.mxu0 0
        %752 = vmatpush.bf16.msra.mxu0 0
        %753 = vmatpush.bf16.msra.mxu0 %v716
        %754 = vmatpush.bf16.msra.mxu0 %v696
        %755 = vmatmul.bf16.gmra.mxu0 %v707
        %v756 = vpop.f32.mrf.mxu0
        %v757 = vadd.f32 0.0, %v756
        %v758 = vpop.f32.mrf.mxu0
        %759 = vdwg.mxu0
        %760 = vmatpush.bf16.msra.mxu0 0
        %761 = vmatpush.bf16.msra.mxu0 0
        %762 = vmatpush.bf16.msra.mxu0 0
        %763 = vmatpush.bf16.msra.mxu0 0
        %764 = vmatpush.bf16.msra.mxu0 0
        %765 = vmatpush.bf16.msra.mxu0 0
        %766 = vmatpush.bf16.msra.mxu0 %v719
        %767 = vmatpush.bf16.msra.mxu0 %v697
        %768 = vmatmul.bf16.gmra.mxu0 %v707
        %v769 = vpop.f32.mrf.mxu0
        %v770 = vadd.f32 0.0, %v769
        %v771 = vpop.f32.mrf.mxu0
        %772 = vdwg.mxu0
        %v773 = vpack.c.bf16 %v522, %v509
        %v774 = vpack.c.bf16 %v548, %v535
        %v775 = vpack.c.bf16 %v633, %v620
        %v776 = vpack.c.bf16 %v659, %v646
        %v777 = vpack.c.bf16 %v744, %v731
        %v778 = vpack.c.bf16 %v770, %v757
        %vm779 = vcmask 523264
        %v781 = vsel %vm779, %v773, 0
        %v784 = vsel %vm779, %v775, 0
        %786 = vmatpush.bf16.xpose.msra.mxu0 0
        %787 = vmatpush.bf16.xpose.msra.mxu0 0
        %788 = vmatpush.bf16.xpose.msra.mxu0 0
        %789 = vmatpush.bf16.xpose.msra.mxu0 0
        %790 = vmatpush.bf16.xpose.msra.mxu0 0
        %791 = vmatpush.bf16.xpose.msra.mxu0 0
        %792 = vmatpush.bf16.xpose.msra.mxu0 0
        %793 = vmatpush.bf16.xpose.msra.mxu0 %v784
        %794 = vmatmul.bf16.gmra.mxu0 %v781
        %v795 = vpop.f32.mrf.mxu0
        %v796 = vadd.f32 %v437, %v795
        %v797 = vpop.f32.mrf.mxu0
        %798 = vdwg.mxu0
        %vm799 = vcmask 64512
        %v800 = vsel %vm799, %v796, -inf
        %801 = vmax.xlane.f32.xlu0 %v800
        %v802 = vpop.xlane.xlu0 %801
        %v803 = vsub.f32 %v796, %v802
        %v804 = vmul.f32 %v803, 1.442695
        %v805 = vpow.pop %v804
        %v806 = vsel %vm799, %v805, 0.0
        %807 = vadd.xlane.f32.xlu0 %v806
        %v808 = vpop.xlane.xlu0 %807
        %v809 = vrcp.pop %v808
        %v810 = vmul.f32 %v805, %v809
        %v811 = vpack.c.bf16 %v810, %v810
        %vm812 = vcmask 60416
        %813 = vst.msk [vmem:[%s405] sm:$0xf] %vm812, %v811
        %v815 = vsel %vm799, %v811, 0
        %vm817 = vcmask 1043456
        %v819 = vsel %vm817, %v777, 0
        %821 = vmatpush.bf16.msra.mxu0 0
        %822 = vmatpush.bf16.msra.mxu0 0
        %823 = vmatpush.bf16.msra.mxu0 0
        %824 = vmatpush.bf16.msra.mxu0 0
        %825 = vmatpush.bf16.msra.mxu0 0
        %826 = vmatpush.bf16.msra.mxu0 0
        %827 = vmatpush.bf16.msra.mxu0 0
        %828 = vmatpush.bf16.msra.mxu0 %v819
        %829 = vmatmul.bf16.gmra.mxu0 %v815
        %v830 = vpop.f32.mrf.mxu0
        %v831 = vadd.f32 0.0, %v830
        %v832 = vpop.f32.mrf.mxu0
        %833 = vdwg.mxu0
        %v834 = vpack.c.bf16 %v831, %v831
        %vm835 = vcmask 519168
        %836 = vst.msk [vmem:[#allocation2] sm:$0xf] %vm835, %v834
        %v838 = vunpack.c.l.b16 %v773
        %v839 = vpack.c.b16 %v838, %v838
        %840 = vrot.lane.b32.xlu0 %v839, 64
        %v841 = vpop.permute.xlu0 %840
        %v843 = vunpack.c.l.b16 %v775
        %v844 = vpack.c.b16 %v843, %v843
        %845 = vrot.lane.b32.xlu0 %v844, 64
        %v846 = vpop.permute.xlu0 %845
        %v848 = vsel %vm779, %v841, 0
        %v851 = vsel %vm779, %v846, 0
        %853 = vmatpush.bf16.xpose.msra.mxu0 0
        %854 = vmatpush.bf16.xpose.msra.mxu0 0
        %855 = vmatpush.bf16.xpose.msra.mxu0 0
        %856 = vmatpush.bf16.xpose.msra.mxu0 0
        %857 = vmatpush.bf16.xpose.msra.mxu0 0
        %858 = vmatpush.bf16.xpose.msra.mxu0 0
        %859 = vmatpush.bf16.xpose.msra.mxu0 0
        %860 = vmatpush.bf16.xpose.msra.mxu0 %v851
        %861 = vmatmul.bf16.gmra.mxu0 %v848
        %v862 = vpop.f32.mrf.mxu0
        %v863 = vadd.f32 %v437, %v862
        %v864 = vpop.f32.mrf.mxu0
        %865 = vdwg.mxu0
        %v866 = vsel %vm799, %v863, -inf
        %867 = vmax.xlane.f32.xlu0 %v866
        %v868 = vpop.xlane.xlu0 %867
        %v869 = vsub.f32 %v863, %v868
        %v870 = vmul.f32 %v869, 1.442695
        %v871 = vpow.pop %v870
        %v872 = vsel %vm799, %v871, 0.0
        %873 = vadd.xlane.f32.xlu0 %v872
        %v874 = vpop.xlane.xlu0 %873
        %v875 = vrcp.pop %v874
        %v876 = vmul.f32 %v871, %v875
        %v877 = vpack.c.bf16 %v876, %v876
        %s878 = scalar_lea.vmem %s405, 4 [#allocation5]
        %879 = vst.msk [vmem:[%s878] sm:$0xf] %vm812, %v877
        %v881 = vunpack.c.l.b16 %v777
        %v882 = vpack.c.b16 %v881, %v881
        %883 = vrot.lane.b32.xlu0 %v882, 64
        %v884 = vpop.permute.xlu0 %883
        %v886 = vsel %vm799, %v877, 0
        %v889 = vsel %vm817, %v884, 0
        %891 = vmatpush.bf16.msra.mxu0 0
        %892 = vmatpush.bf16.msra.mxu0 0
        %893 = vmatpush.bf16.msra.mxu0 0
        %894 = vmatpush.bf16.msra.mxu0 0
        %895 = vmatpush.bf16.msra.mxu0 0
        %896 = vmatpush.bf16.msra.mxu0 0
        %897 = vmatpush.bf16.msra.mxu0 0
        %898 = vmatpush.bf16.msra.mxu0 %v889
        %899 = vmatmul.bf16.gmra.mxu0 %v886
        %v900 = vpop.f32.mrf.mxu0
        %v901 = vadd.f32 0.0, %v900
        %v902 = vpop.f32.mrf.mxu0
        %903 = vdwg.mxu0
        %v904 = vpack.c.bf16 %v901, %v901
        %906 = vrot.lane.b32.xlu0 %v904, 64
        %v907 = vpop.permute.xlu0 %906
        %vm909 = vcmask 1043968
        %910 = vst.msk [vmem:[#allocation2] sm:$0xf] %vm909, %v907
        %v911 = vunpack.c.h.b16 %v773
        %v912 = vpack.c.b16 %v911, %v911
        %v913 = vunpack.c.h.b16 %v775
        %v914 = vpack.c.b16 %v913, %v913
        %v916 = vsel %vm779, %v912, 0
        %v919 = vsel %vm779, %v914, 0
        %921 = vmatpush.bf16.xpose.msra.mxu0 0
        %922 = vmatpush.bf16.xpose.msra.mxu0 0
        %923 = vmatpush.bf16.xpose.msra.mxu0 0
        %924 = vmatpush.bf16.xpose.msra.mxu0 0
        %925 = vmatpush.bf16.xpose.msra.mxu0 0
        %926 = vmatpush.bf16.xpose.msra.mxu0 0
        %927 = vmatpush.bf16.xpose.msra.mxu0 0
        %928 = vmatpush.bf16.xpose.msra.mxu0 %v919
        %929 = vmatmul.bf16.gmra.mxu0 %v916
        %v930 = vpop.f32.mrf.mxu0
        %v931 = vadd.f32 %v437, %v930
        %v932 = vpop.f32.mrf.mxu0
        %933 = vdwg.mxu0
        %v934 = vsel %vm799, %v931, -inf
        %935 = vmax.xlane.f32.xlu0 %v934
        %v936 = vpop.xlane.xlu0 %935
        %v937 = vsub.f32 %v931, %v936
        %v938 = vmul.f32 %v937, 1.442695
        %v939 = vpow.pop %v938
        %v940 = vsel %vm799, %v939, 0.0
        %941 = vadd.xlane.f32.xlu0 %v940
        %v942 = vpop.xlane.xlu0 %941
        %v943 = vrcp.pop %v942
        %v944 = vmul.f32 %v939, %v943
        %v945 = vpack.c.bf16 %v944, %v944
        %s946 = scalar_lea.vmem %s405, 8 [#allocation5]
        %947 = vst.msk [vmem:[%s946] sm:$0xf] %vm812, %v945
        %v948 = vunpack.c.h.b16 %v777
        %v949 = vpack.c.b16 %v948, %v948
        %v951 = vsel %vm799, %v945, 0
        %v954 = vsel %vm817, %v949, 0
        %956 = vmatpush.bf16.msra.mxu0 0
        %957 = vmatpush.bf16.msra.mxu0 0
        %958 = vmatpush.bf16.msra.mxu0 0
        %959 = vmatpush.bf16.msra.mxu0 0
        %960 = vmatpush.bf16.msra.mxu0 0
        %961 = vmatpush.bf16.msra.mxu0 0
        %962 = vmatpush.bf16.msra.mxu0 0
        %963 = vmatpush.bf16.msra.mxu0 %v954
        %964 = vmatmul.bf16.gmra.mxu0 %v951
        %v965 = vpop.f32.mrf.mxu0
        %v966 = vadd.f32 0.0, %v965
        %v967 = vpop.f32.mrf.mxu0
        %968 = vdwg.mxu0
        %v969 = vpack.c.bf16 %v966, %v966
        %970 = vst.msk [vmem:[#allocation2 + $0x4] sm:$0xf] %vm835, %v969
        %971 = vrot.lane.b32.xlu0 %v912, 64
        %v972 = vpop.permute.xlu0 %971
        %973 = vrot.lane.b32.xlu0 %v914, 64
        %v974 = vpop.permute.xlu0 %973
        %v976 = vsel %vm779, %v972, 0
        %v979 = vsel %vm779, %v974, 0
        %981 = vmatpush.bf16.xpose.msra.mxu0 0
        %982 = vmatpush.bf16.xpose.msra.mxu0 0
        %983 = vmatpush.bf16.xpose.msra.mxu0 0
        %984 = vmatpush.bf16.xpose.msra.mxu0 0
        %985 = vmatpush.bf16.xpose.msra.mxu0 0
        %986 = vmatpush.bf16.xpose.msra.mxu0 0
        %987 = vmatpush.bf16.xpose.msra.mxu0 0
        %988 = vmatpush.bf16.xpose.msra.mxu0 %v979
        %989 = vmatmul.bf16.gmra.mxu0 %v976
        %v990 = vpop.f32.mrf.mxu0
        %v991 = vadd.f32 %v437, %v990
        %v992 = vpop.f32.mrf.mxu0
        %993 = vdwg.mxu0
        %v994 = vsel %vm799, %v991, -inf
        %995 = vmax.xlane.f32.xlu0 %v994
        %v996 = vpop.xlane.xlu0 %995
        %v997 = vsub.f32 %v991, %v996
        %v998 = vmul.f32 %v997, 1.442695
        %v999 = vpow.pop %v998
        %v1000 = vsel %vm799, %v999, 0.0
        %1001 = vadd.xlane.f32.xlu0 %v1000
        %v1002 = vpop.xlane.xlu0 %1001
        %v1003 = vrcp.pop %v1002
        %v1004 = vmul.f32 %v999, %v1003
        %v1005 = vpack.c.bf16 %v1004, %v1004
        %s1006 = scalar_lea.vmem %s405, 12 [#allocation5]
        %1007 = vst.msk [vmem:[%s1006] sm:$0xf] %vm812, %v1005
        %1008 = vrot.lane.b32.xlu0 %v949, 64
        %v1009 = vpop.permute.xlu0 %1008
        %v1011 = vsel %vm799, %v1005, 0
        %v1014 = vsel %vm817, %v1009, 0
        %1016 = vmatpush.bf16.msra.mxu0 0
        %1017 = vmatpush.bf16.msra.mxu0 0
        %1018 = vmatpush.bf16.msra.mxu0 0
        %1019 = vmatpush.bf16.msra.mxu0 0
        %1020 = vmatpush.bf16.msra.mxu0 0
        %1021 = vmatpush.bf16.msra.mxu0 0
        %1022 = vmatpush.bf16.msra.mxu0 0
        %1023 = vmatpush.bf16.msra.mxu0 %v1014
        %1024 = vmatmul.bf16.gmra.mxu0 %v1011
        %v1025 = vpop.f32.mrf.mxu0
        %v1026 = vadd.f32 0.0, %v1025
        %v1027 = vpop.f32.mrf.mxu0
        %1028 = vdwg.mxu0
        %v1029 = vpack.c.bf16 %v1026, %v1026
        %1031 = vrot.lane.b32.xlu0 %v1029, 64
        %v1032 = vpop.permute.xlu0 %1031
        %1034 = vst.msk [vmem:[#allocation2 + $0x4] sm:$0xf] %vm909, %v1032
        %v1036 = vsel %vm779, %v774, 0
        %v1039 = vsel %vm779, %v776, 0
        %1041 = vmatpush.bf16.xpose.msra.mxu0 0
        %1042 = vmatpush.bf16.xpose.msra.mxu0 0
        %1043 = vmatpush.bf16.xpose.msra.mxu0 0
        %1044 = vmatpush.bf16.xpose.msra.mxu0 0
        %1045 = vmatpush.bf16.xpose.msra.mxu0 0
        %1046 = vmatpush.bf16.xpose.msra.mxu0 0
        %1047 = vmatpush.bf16.xpose.msra.mxu0 0
        %1048 = vmatpush.bf16.xpose.msra.mxu0 %v1039
        %1049 = vmatmul.bf16.gmra.mxu0 %v1036
        %v1050 = vpop.f32.mrf.mxu0
        %v1051 = vadd.f32 %v437, %v1050
        %v1052 = vpop.f32.mrf.mxu0
        %1053 = vdwg.mxu0
        %v1054 = vsel %vm799, %v1051, -inf
        %1055 = vmax.xlane.f32.xlu0 %v1054
        %v1056 = vpop.xlane.xlu0 %1055
        %v1057 = vsub.f32 %v1051, %v1056
        %v1058 = vmul.f32 %v1057, 1.442695
        %v1059 = vpow.pop %v1058
        %v1060 = vsel %vm799, %v1059, 0.0
        %1061 = vadd.xlane.f32.xlu0 %v1060
        %v1062 = vpop.xlane.xlu0 %1061
        %v1063 = vrcp.pop %v1062
        %v1064 = vmul.f32 %v1059, %v1063
        %v1065 = vpack.c.bf16 %v1064, %v1064
        %s1066 = scalar_lea.vmem %s405, 16 [#allocation5]
        %1067 = vst.msk [vmem:[%s1066] sm:$0xf] %vm812, %v1065
        %v1069 = vsel %vm799, %v1065, 0
        %v1072 = vsel %vm817, %v778, 0
        %1074 = vmatpush.bf16.msra.mxu0 0
        %1075 = vmatpush.bf16.msra.mxu0 0
        %1076 = vmatpush.bf16.msra.mxu0 0
        %1077 = vmatpush.bf16.msra.mxu0 0
        %1078 = vmatpush.bf16.msra.mxu0 0
        %1079 = vmatpush.bf16.msra.mxu0 0
        %1080 = vmatpush.bf16.msra.mxu0 0
        %1081 = vmatpush.bf16.msra.mxu0 %v1072
        %1082 = vmatmul.bf16.gmra.mxu0 %v1069
        %v1083 = vpop.f32.mrf.mxu0
        %v1084 = vadd.f32 0.0, %v1083
        %v1085 = vpop.f32.mrf.mxu0
        %1086 = vdwg.mxu0
        %v1087 = vpack.c.bf16 %v1084, %v1084
        %1088 = vst.msk [vmem:[#allocation2 + $0x8] sm:$0xf] %vm835, %v1087
        %v1090 = vunpack.c.l.b16 %v774
        %v1091 = vpack.c.b16 %v1090, %v1090
        %1092 = vrot.lane.b32.xlu0 %v1091, 64
        %v1093 = vpop.permute.xlu0 %1092
        %v1095 = vunpack.c.l.b16 %v776
        %v1096 = vpack.c.b16 %v1095, %v1095
        %1097 = vrot.lane.b32.xlu0 %v1096, 64
        %v1098 = vpop.permute.xlu0 %1097
        %v1100 = vsel %vm779, %v1093, 0
        %v1103 = vsel %vm779, %v1098, 0
        %1105 = vmatpush.bf16.xpose.msra.mxu0 0
        %1106 = vmatpush.bf16.xpose.msra.mxu0 0
        %1107 = vmatpush.bf16.xpose.msra.mxu0 0
        %1108 = vmatpush.bf16.xpose.msra.mxu0 0
        %1109 = vmatpush.bf16.xpose.msra.mxu0 0
        %1110 = vmatpush.bf16.xpose.msra.mxu0 0
        %1111 = vmatpush.bf16.xpose.msra.mxu0 0
        %1112 = vmatpush.bf16.xpose.msra.mxu0 %v1103
        %1113 = vmatmul.bf16.gmra.mxu0 %v1100
        %v1114 = vpop.f32.mrf.mxu0
        %v1115 = vadd.f32 %v437, %v1114
        %v1116 = vpop.f32.mrf.mxu0
        %1117 = vdwg.mxu0
        %v1118 = vsel %vm799, %v1115, -inf
        %1119 = vmax.xlane.f32.xlu0 %v1118
        %v1120 = vpop.xlane.xlu0 %1119
        %v1121 = vsub.f32 %v1115, %v1120
        %v1122 = vmul.f32 %v1121, 1.442695
        %v1123 = vpow.pop %v1122
        %v1124 = vsel %vm799, %v1123, 0.0
        %1125 = vadd.xlane.f32.xlu0 %v1124
        %v1126 = vpop.xlane.xlu0 %1125
        %v1127 = vrcp.pop %v1126
        %v1128 = vmul.f32 %v1123, %v1127
        %v1129 = vpack.c.bf16 %v1128, %v1128
        %s1130 = scalar_lea.vmem %s405, 20 [#allocation5]
        %1131 = vst.msk [vmem:[%s1130] sm:$0xf] %vm812, %v1129
        %v1133 = vunpack.c.l.b16 %v778
        %v1134 = vpack.c.b16 %v1133, %v1133
        %1135 = vrot.lane.b32.xlu0 %v1134, 64
        %v1136 = vpop.permute.xlu0 %1135
        %v1138 = vsel %vm799, %v1129, 0
        %v1141 = vsel %vm817, %v1136, 0
        %1143 = vmatpush.bf16.msra.mxu0 0
        %1144 = vmatpush.bf16.msra.mxu0 0
        %1145 = vmatpush.bf16.msra.mxu0 0
        %1146 = vmatpush.bf16.msra.mxu0 0
        %1147 = vmatpush.bf16.msra.mxu0 0
        %1148 = vmatpush.bf16.msra.mxu0 0
        %1149 = vmatpush.bf16.msra.mxu0 0
        %1150 = vmatpush.bf16.msra.mxu0 %v1141
        %1151 = vmatmul.bf16.gmra.mxu0 %v1138
        %v1152 = vpop.f32.mrf.mxu0
        %v1153 = vadd.f32 0.0, %v1152
        %v1154 = vpop.f32.mrf.mxu0
        %1155 = vdwg.mxu0
        %v1156 = vpack.c.bf16 %v1153, %v1153
        %1158 = vrot.lane.b32.xlu0 %v1156, 64
        %v1159 = vpop.permute.xlu0 %1158
        %1161 = vst.msk [vmem:[#allocation2 + $0x8] sm:$0xf] %vm909, %v1159
        %v1162 = vunpack.c.h.b16 %v774
        %v1163 = vpack.c.b16 %v1162, %v1162
        %v1164 = vunpack.c.h.b16 %v776
        %v1165 = vpack.c.b16 %v1164, %v1164
        %v1167 = vsel %vm779, %v1163, 0
        %v1170 = vsel %vm779, %v1165, 0
        %1172 = vmatpush.bf16.xpose.msra.mxu0 0
        %1173 = vmatpush.bf16.xpose.msra.mxu0 0
        %1174 = vmatpush.bf16.xpose.msra.mxu0 0
        %1175 = vmatpush.bf16.xpose.msra.mxu0 0
        %1176 = vmatpush.bf16.xpose.msra.mxu0 0
        %1177 = vmatpush.bf16.xpose.msra.mxu0 0
        %1178 = vmatpush.bf16.xpose.msra.mxu0 0
        %1179 = vmatpush.bf16.xpose.msra.mxu0 %v1170
        %1180 = vmatmul.bf16.gmra.mxu0 %v1167
        %v1181 = vpop.f32.mrf.mxu0
        %v1182 = vadd.f32 %v437, %v1181
        %v1183 = vpop.f32.mrf.mxu0
        %1184 = vdwg.mxu0
        %v1185 = vsel %vm799, %v1182, -inf
        %1186 = vmax.xlane.f32.xlu0 %v1185
        %v1187 = vpop.xlane.xlu0 %1186
        %v1188 = vsub.f32 %v1182, %v1187
        %v1189 = vmul.f32 %v1188, 1.442695
        %v1190 = vpow.pop %v1189
        %v1191 = vsel %vm799, %v1190, 0.0
        %1192 = vadd.xlane.f32.xlu0 %v1191
        %v1193 = vpop.xlane.xlu0 %1192
        %v1194 = vrcp.pop %v1193
        %v1195 = vmul.f32 %v1190, %v1194
        %v1196 = vpack.c.bf16 %v1195, %v1195
        %s1197 = scalar_lea.vmem %s405, 24 [#allocation5]
        %1198 = vst.msk [vmem:[%s1197] sm:$0xf] %vm812, %v1196
        %v1199 = vunpack.c.h.b16 %v778
        %v1200 = vpack.c.b16 %v1199, %v1199
        %v1202 = vsel %vm799, %v1196, 0
        %v1205 = vsel %vm817, %v1200, 0
        %1207 = vmatpush.bf16.msra.mxu0 0
        %1208 = vmatpush.bf16.msra.mxu0 0
        %1209 = vmatpush.bf16.msra.mxu0 0
        %1210 = vmatpush.bf16.msra.mxu0 0
        %1211 = vmatpush.bf16.msra.mxu0 0
        %1212 = vmatpush.bf16.msra.mxu0 0
        %1213 = vmatpush.bf16.msra.mxu0 0
        %1214 = vmatpush.bf16.msra.mxu0 %v1205
        %1215 = vmatmul.bf16.gmra.mxu0 %v1202
        %v1216 = vpop.f32.mrf.mxu0
        %v1217 = vadd.f32 0.0, %v1216
        %v1218 = vpop.f32.mrf.mxu0
        %1219 = vdwg.mxu0
        %v1220 = vpack.c.bf16 %v1217, %v1217
        %1221 = vst.msk [vmem:[#allocation2 + $0xc] sm:$0xf] %vm835, %v1220
        %1222 = vrot.lane.b32.xlu0 %v1163, 64
        %v1223 = vpop.permute.xlu0 %1222
        %1224 = vrot.lane.b32.xlu0 %v1165, 64
        %v1225 = vpop.permute.xlu0 %1224
        %v1227 = vsel %vm779, %v1223, 0
        %v1230 = vsel %vm779, %v1225, 0
        %1232 = vmatpush.bf16.xpose.msra.mxu0 0
        %1233 = vmatpush.bf16.xpose.msra.mxu0 0
        %1234 = vmatpush.bf16.xpose.msra.mxu0 0
        %1235 = vmatpush.bf16.xpose.msra.mxu0 0
        %1236 = vmatpush.bf16.xpose.msra.mxu0 0
        %1237 = vmatpush.bf16.xpose.msra.mxu0 0
        %1238 = vmatpush.bf16.xpose.msra.mxu0 0
        %1239 = vmatpush.bf16.xpose.msra.mxu0 %v1230
        %1240 = vmatmul.bf16.gmra.mxu0 %v1227
        %v1241 = vpop.f32.mrf.mxu0
        %v1242 = vadd.f32 %v437, %v1241
        %v1243 = vpop.f32.mrf.mxu0
        %1244 = vdwg.mxu0
        %v1245 = vsel %vm799, %v1242, -inf
        %1246 = vmax.xlane.f32.xlu0 %v1245
        %v1247 = vpop.xlane.xlu0 %1246
        %v1248 = vsub.f32 %v1242, %v1247
        %v1249 = vmul.f32 %v1248, 1.442695
        %v1250 = vpow.pop %v1249
        %v1251 = vsel %vm799, %v1250, 0.0
        %1252 = vadd.xlane.f32.xlu0 %v1251
        %v1253 = vpop.xlane.xlu0 %1252
        %v1254 = vrcp.pop %v1253
        %v1255 = vmul.f32 %v1250, %v1254
        %v1256 = vpack.c.bf16 %v1255, %v1255
        %s1257 = scalar_lea.vmem %s405, 28 [#allocation5]
        %1258 = vst.msk [vmem:[%s1257] sm:$0xf] %vm812, %v1256
        %1259 = vrot.lane.b32.xlu0 %v1200, 64
        %v1260 = vpop.permute.xlu0 %1259
        %v1262 = vsel %vm799, %v1256, 0
        %v1265 = vsel %vm817, %v1260, 0
        %1267 = vmatpush.bf16.msra.mxu0 0
        %1268 = vmatpush.bf16.msra.mxu0 0
        %1269 = vmatpush.bf16.msra.mxu0 0
        %1270 = vmatpush.bf16.msra.mxu0 0
        %1271 = vmatpush.bf16.msra.mxu0 0
        %1272 = vmatpush.bf16.msra.mxu0 0
        %1273 = vmatpush.bf16.msra.mxu0 0
        %1274 = vmatpush.bf16.msra.mxu0 %v1265
        %1275 = vmatmul.bf16.gmra.mxu0 %v1262
        %v1276 = vpop.f32.mrf.mxu0
        %v1277 = vadd.f32 0.0, %v1276
        %v1278 = vpop.f32.mrf.mxu0
        %1279 = vdwg.mxu0
        %v1280 = vpack.c.bf16 %v1277, %v1277
        %1282 = vrot.lane.b32.xlu0 %v1280, 64
        %v1283 = vpop.permute.xlu0 %1282
        %1285 = vst.msk [vmem:[#allocation2 + $0xc] sm:$0xf] %vm909, %v1283
        %v1286 = vld [vmem:[#allocation2] sm:$0xff]
        %v1287 = vld [vmem:[#allocation2 + $0x8] sm:$0xff]
        %v1288 = vld [vmem:[%s7] sm:$0xf]
        %v1289 = vld [vmem:[%s7 + $0x4] sm:$0xf]
        %v1290 = vld [vmem:[%s7 + $0x8] sm:$0xf]
        %v1291 = vld [vmem:[%s7 + $0xc] sm:$0xf]
        %v1292 = vld [vmem:[%s7 + $0x10] sm:$0xf]
        %v1293 = vld [vmem:[%s7 + $0x14] sm:$0xf]
        %v1294 = vld [vmem:[%s7 + $0x18] sm:$0xf]
        %v1295 = vld [vmem:[%s7 + $0x1c] sm:$0xf]
        %v1296 = vld [vmem:[%s7 + $0x20] sm:$0xf]
        %v1297 = vld [vmem:[%s7 + $0x24] sm:$0xf]
        %v1298 = vld [vmem:[%s7 + $0x28] sm:$0xf]
        %v1299 = vld [vmem:[%s7 + $0x2c] sm:$0xf]
        %v1300 = vld [vmem:[%s7 + $0x30] sm:$0xf]
        %v1301 = vld [vmem:[%s7 + $0x34] sm:$0xf]
        %v1302 = vld [vmem:[%s7 + $0x38] sm:$0xf]
        %v1303 = vld [vmem:[%s7 + $0x3c] sm:$0xf]
        %v1304 = vld [vmem:[%s7 + $0x40] sm:$0xf]
        %v1305 = vld [vmem:[%s7 + $0x44] sm:$0xf]
        %v1306 = vld [vmem:[%s7 + $0x48] sm:$0xf]
        %v1307 = vld [vmem:[%s7 + $0x4c] sm:$0xf]
        %v1308 = vld [vmem:[%s7 + $0x50] sm:$0xf]
        %v1309 = vld [vmem:[%s7 + $0x54] sm:$0xf]
        %v1310 = vld [vmem:[%s7 + $0x58] sm:$0xf]
        %v1311 = vld [vmem:[%s7 + $0x5c] sm:$0xf]
        %v1312 = vld [vmem:[%s7 + $0x60] sm:$0xf]
        %v1313 = vld [vmem:[%s7 + $0x64] sm:$0xf]
        %v1314 = vld [vmem:[%s7 + $0x68] sm:$0xf]
        %v1315 = vld [vmem:[%s7 + $0x6c] sm:$0xf]
        %v1316 = vld [vmem:[%s7 + $0x70] sm:$0xf]
        %v1317 = vld [vmem:[%s7 + $0x74] sm:$0xf]
        %v1318 = vld [vmem:[%s7 + $0x78] sm:$0xf]
        %v1319 = vld [vmem:[%s7 + $0x7c] sm:$0xf]
        %v1320 = vld [vmem:[%s7 + $0x80] sm:$0xf]
        %v1321 = vld [vmem:[%s7 + $0x84] sm:$0xf]
        %v1322 = vld [vmem:[%s7 + $0x88] sm:$0xf]
        %v1323 = vld [vmem:[%s7 + $0x8c] sm:$0xf]
        %v1324 = vld [vmem:[%s7 + $0x90] sm:$0xf]
        %v1325 = vld [vmem:[%s7 + $0x94] sm:$0xf]
        %v1326 = vld [vmem:[%s7 + $0x98] sm:$0xf]
        %v1327 = vld [vmem:[%s7 + $0x9c] sm:$0xf]
        %v1328 = vld [vmem:[%s7 + $0xa0] sm:$0xf]
        %v1329 = vld [vmem:[%s7 + $0xa4] sm:$0xf]
        %v1330 = vld [vmem:[%s7 + $0xa8] sm:$0xf]
        %v1331 = vld [vmem:[%s7 + $0xac] sm:$0xf]
        %v1332 = vld [vmem:[%s7 + $0xb0] sm:$0xf]
        %v1333 = vld [vmem:[%s7 + $0xb4] sm:$0xf]
        %v1334 = vld [vmem:[%s7 + $0xb8] sm:$0xf]
        %v1335 = vld [vmem:[%s7 + $0xbc] sm:$0xf]
        %v1336 = vld [vmem:[%s7 + $0xc0] sm:$0xf]
        %v1337 = vld [vmem:[%s7 + $0xc4] sm:$0xf]
        %v1338 = vld [vmem:[%s7 + $0xc8] sm:$0xf]
        %v1339 = vld [vmem:[%s7 + $0xcc] sm:$0xf]
        %v1340 = vld [vmem:[%s7 + $0xd0] sm:$0xf]
        %v1341 = vld [vmem:[%s7 + $0xd4] sm:$0xf]
        %v1342 = vld [vmem:[%s7 + $0xd8] sm:$0xf]
        %v1343 = vld [vmem:[%s7 + $0xdc] sm:$0xf]
        %v1344 = vld [vmem:[%s7 + $0xe0] sm:$0xf]
        %v1345 = vld [vmem:[%s7 + $0xe4] sm:$0xf]
        %v1346 = vld [vmem:[%s7 + $0xe8] sm:$0xf]
        %v1347 = vld [vmem:[%s7 + $0xec] sm:$0xf]
        %v1348 = vld [vmem:[%s7 + $0xf0] sm:$0xf]
        %v1349 = vld [vmem:[%s7 + $0xf4] sm:$0xf]
        %v1350 = vld [vmem:[%s7 + $0xf8] sm:$0xf]
        %v1351 = vld [vmem:[%s7 + $0xfc] sm:$0xf]
        %v1354 = vunpack.c.l.b16 %v1286
        %v1355 = vunpack.c.h.b16 %v1286
        %v1356 = vunpack.c.l.b16 %v1287
        %v1357 = vunpack.c.h.b16 %v1287
        %v1358 = vpack.c.b16 %v1354, %v1354
        %v1359 = vpack.c.b16 %v1355, %v1355
        %v1360 = vpack.c.b16 %v1356, %v1356
        %v1361 = vpack.c.b16 %v1357, %v1357
        %v1430 = vunpack.c.l.b16 %v1288
        %v1431 = vunpack.c.l.b16 %v1289
        %v1432 = vunpack.c.l.b16 %v1290
        %v1433 = vunpack.c.l.b16 %v1291
        %v1434 = vunpack.c.l.b16 %v1292
        %v1435 = vunpack.c.l.b16 %v1293
        %v1436 = vunpack.c.l.b16 %v1294
        %v1437 = vunpack.c.l.b16 %v1295
        %v1438 = vunpack.c.l.b16 %v1296
        %v1439 = vunpack.c.l.b16 %v1297
        %v1440 = vunpack.c.l.b16 %v1298
        %v1441 = vunpack.c.l.b16 %v1299
        %v1442 = vunpack.c.l.b16 %v1300
        %v1443 = vunpack.c.l.b16 %v1301
        %v1444 = vunpack.c.l.b16 %v1302
        %v1445 = vunpack.c.l.b16 %v1303
        %v1446 = vunpack.c.l.b16 %v1304
        %v1447 = vunpack.c.l.b16 %v1305
        %v1448 = vunpack.c.l.b16 %v1306
        %v1449 = vunpack.c.l.b16 %v1307
        %v1450 = vunpack.c.l.b16 %v1308
        %v1451 = vunpack.c.l.b16 %v1309
        %v1452 = vunpack.c.l.b16 %v1310
        %v1453 = vunpack.c.l.b16 %v1311
        %v1454 = vunpack.c.l.b16 %v1312
        %v1455 = vunpack.c.l.b16 %v1313
        %v1456 = vunpack.c.l.b16 %v1314
        %v1457 = vunpack.c.l.b16 %v1315
        %v1458 = vunpack.c.l.b16 %v1316
        %v1459 = vunpack.c.l.b16 %v1317
        %v1460 = vunpack.c.l.b16 %v1318
        %v1461 = vunpack.c.l.b16 %v1319
        %v1462 = vunpack.c.l.b16 %v1320
        %v1463 = vunpack.c.l.b16 %v1321
        %v1464 = vunpack.c.l.b16 %v1322
        %v1465 = vunpack.c.l.b16 %v1323
        %v1466 = vunpack.c.l.b16 %v1324
        %v1467 = vunpack.c.l.b16 %v1325
        %v1468 = vunpack.c.l.b16 %v1326
        %v1469 = vunpack.c.l.b16 %v1327
        %v1470 = vunpack.c.l.b16 %v1328
        %v1471 = vunpack.c.l.b16 %v1329
        %v1472 = vunpack.c.l.b16 %v1330
        %v1473 = vunpack.c.l.b16 %v1331
        %v1474 = vunpack.c.l.b16 %v1332
        %v1475 = vunpack.c.l.b16 %v1333
        %v1476 = vunpack.c.l.b16 %v1334
        %v1477 = vunpack.c.l.b16 %v1335
        %v1478 = vunpack.c.l.b16 %v1336
        %v1479 = vunpack.c.l.b16 %v1337
        %v1480 = vunpack.c.l.b16 %v1338
        %v1481 = vunpack.c.l.b16 %v1339
        %v1482 = vunpack.c.l.b16 %v1340
        %v1483 = vunpack.c.l.b16 %v1341
        %v1484 = vunpack.c.l.b16 %v1342
        %v1485 = vunpack.c.l.b16 %v1343
        %v1486 = vunpack.c.l.b16 %v1344
        %v1487 = vunpack.c.l.b16 %v1345
        %v1488 = vunpack.c.l.b16 %v1346
        %v1489 = vunpack.c.l.b16 %v1347
        %v1490 = vunpack.c.l.b16 %v1348
        %v1491 = vunpack.c.l.b16 %v1349
        %v1492 = vunpack.c.l.b16 %v1350
        %v1493 = vunpack.c.l.b16 %v1351
        %v1494 = vpack.c.b16 %v1431, %v1430
        %v1495 = vpack.c.b16 %v1433, %v1432
        %v1496 = vpack.c.b16 %v1435, %v1434
        %v1497 = vpack.c.b16 %v1437, %v1436
        %v1498 = vpack.c.b16 %v1439, %v1438
        %v1499 = vpack.c.b16 %v1441, %v1440
        %v1500 = vpack.c.b16 %v1443, %v1442
        %v1501 = vpack.c.b16 %v1445, %v1444
        %v1502 = vpack.c.b16 %v1447, %v1446
        %v1503 = vpack.c.b16 %v1449, %v1448
        %v1504 = vpack.c.b16 %v1451, %v1450
        %v1505 = vpack.c.b16 %v1453, %v1452
        %v1506 = vpack.c.b16 %v1455, %v1454
        %v1507 = vpack.c.b16 %v1457, %v1456
        %v1508 = vpack.c.b16 %v1459, %v1458
        %v1509 = vpack.c.b16 %v1461, %v1460
        %v1510 = vpack.c.b16 %v1463, %v1462
        %v1511 = vpack.c.b16 %v1465, %v1464
        %v1512 = vpack.c.b16 %v1467, %v1466
        %v1513 = vpack.c.b16 %v1469, %v1468
        %v1514 = vpack.c.b16 %v1471, %v1470
        %v1515 = vpack.c.b16 %v1473, %v1472
        %v1516 = vpack.c.b16 %v1475, %v1474
        %v1517 = vpack.c.b16 %v1477, %v1476
        %v1518 = vpack.c.b16 %v1479, %v1478
        %v1519 = vpack.c.b16 %v1481, %v1480
        %v1520 = vpack.c.b16 %v1483, %v1482
        %v1521 = vpack.c.b16 %v1485, %v1484
        %v1522 = vpack.c.b16 %v1487, %v1486
        %v1523 = vpack.c.b16 %v1489, %v1488
        %v1524 = vpack.c.b16 %v1491, %v1490
        %v1525 = vpack.c.b16 %v1493, %v1492
        %1558 = vmatpush.bf16.msra.mxu0 %v1501
        %1559 = vmatpush.bf16.msra.mxu0 %v1500
        %1560 = vmatpush.bf16.msra.mxu0 %v1499
        %1561 = vmatpush.bf16.msra.mxu0 %v1498
        %1562 = vmatpush.bf16.msra.mxu0 %v1497
        %1563 = vmatpush.bf16.msra.mxu0 %v1496
        %1564 = vmatpush.bf16.msra.mxu0 %v1495
        %1565 = vmatpush.bf16.msra.mxu0 %v1494
        %1566 = vmatmul.bf16.gmra.mxu0 %v1358
        %v1567 = vpop.f32.mrf.mxu0
        %v1568 = vadd.f32 %v429, %v1567
        %v1569 = vpop.f32.mrf.mxu0
        %1570 = vdwg.mxu0
        %1571 = vmatpush.bf16.msra.mxu0 %v1509
        %1572 = vmatpush.bf16.msra.mxu0 %v1508
        %1573 = vmatpush.bf16.msra.mxu0 %v1507
        %1574 = vmatpush.bf16.msra.mxu0 %v1506
        %1575 = vmatpush.bf16.msra.mxu0 %v1505
        %1576 = vmatpush.bf16.msra.mxu0 %v1504
        %1577 = vmatpush.bf16.msra.mxu0 %v1503
        %1578 = vmatpush.bf16.msra.mxu0 %v1502
        %1579 = vmatmul.bf16.gmra.mxu0 %v1359
        %v1580 = vpop.f32.mrf.mxu0
        %v1581 = vadd.f32 %v1568, %v1580
        %v1582 = vpop.f32.mrf.mxu0
        %1583 = vdwg.mxu0
        %1584 = vmatpush.bf16.msra.mxu0 %v1517
        %1585 = vmatpush.bf16.msra.mxu0 %v1516
        %1586 = vmatpush.bf16.msra.mxu0 %v1515
        %1587 = vmatpush.bf16.msra.mxu0 %v1514
        %1588 = vmatpush.bf16.msra.mxu0 %v1513
        %1589 = vmatpush.bf16.msra.mxu0 %v1512
        %1590 = vmatpush.bf16.msra.mxu0 %v1511
        %1591 = vmatpush.bf16.msra.mxu0 %v1510
        %1592 = vmatmul.bf16.gmra.mxu0 %v1360
        %v1593 = vpop.f32.mrf.mxu0
        %v1594 = vadd.f32 %v1581, %v1593
        %v1595 = vpop.f32.mrf.mxu0
        %1596 = vdwg.mxu0
        %1597 = vmatpush.bf16.msra.mxu0 %v1525
        %1598 = vmatpush.bf16.msra.mxu0 %v1524
        %1599 = vmatpush.bf16.msra.mxu0 %v1523
        %1600 = vmatpush.bf16.msra.mxu0 %v1522
        %1601 = vmatpush.bf16.msra.mxu0 %v1521
        %1602 = vmatpush.bf16.msra.mxu0 %v1520
        %1603 = vmatpush.bf16.msra.mxu0 %v1519
        %1604 = vmatpush.bf16.msra.mxu0 %v1518
        %1605 = vmatmul.bf16.gmra.mxu0 %v1361
        %v1606 = vpop.f32.mrf.mxu0
        %v1607 = vadd.f32 %v1594, %v1606
        %v1608 = vpop.f32.mrf.mxu0
        %1609 = vdwg.mxu0
        %v1610 = vsel %vm482, %v1607, 0.0
        %1611 = vadd.xlane.f32.xlu0 %v1610
        %v1612 = vpop.xlane.xlu0 %1611
        %v1613 = vrcp.pop 30.0
        %v1614 = vmul.f32 30.0, %v1613
        %v1615 = vsub.f32 1.0, %v1614
        %v1616 = vmul.f32 %v1613, %v1615
        %v1617 = vadd.f32 %v1613, %v1616
        %vm1618 = vweird.f32 %v1613
        %v1619 = vsel %vm1618, %v1613, %v1617
        %v1620 = vmul.f32 %v1612, %v1619
        %v1621 = vsub.f32 %v1607, %v1620
        %v1622 = vmul.f32 %v1621, %v1621
        %v1623 = vsel %vm482, %v1622, 0.0
        %1624 = vadd.xlane.f32.xlu0 %v1623
        %v1625 = vpop.xlane.xlu0 %1624
        %v1626 = vmul.f32 %v1625, %v1619
        %v1627 = vadd.f32 %v1626, 1e-05
        %v1628 = vrsqrt.pop %v1627
        %v1629 = vmul.f32 %v1628, %v1627
        %v1630 = vmul.f32 %v1629, %v1628
        %v1631 = vmul.f32 0.5, %v1630
        %v1632 = vsub.f32 1.5, %v1631
        %v1633 = vmul.f32 %v1628, %v1632
        %vm1634 = vweird.f32 %v1627
        %vm1635 = vweird.f32 %v1628
        %vm1636 = vmor %vm1634, %vm1635
        %v1637 = vsel %vm1636, %v1628, %v1633
        %v1638 = vmul.f32 %v1621, %v1637
        %1639 = vst.msk [vmem:[%s398] sm:$0xff] %vm482, %v1638
        %s1640 = sand.u32 %s241, 1
        %s1641 = scalar_lea.sflag [#allocation4], %s1640
        %s1642 = sand.u32 %s241, 1
        %s1643 = smul.addr %s1642, 8
        %s1644 = scalar_lea.vmem [#allocation3], %s1643
        %s1645 = sand.u32 %s269, 1
        %s1646 = scalar_lea.sflag [#allocation6], %s1645
        %s1647 = sand.u32 %s269, 1
        %s1648 = smul.addr %s1647, 32
        %s1649 = scalar_lea.vmem [#allocation5], %s1648
        // Predicated region
        $region53: #{multi_head_attention.1} parent=51 // pred_check
          %p1650 = pneg %p251
        $region54: #{multi_head_attention.1} parent=51 // pred_check_branch
          %1652 = sbr.rel (%p1650) target = $region56
        $region55: #{multi_head_attention.1} parent=51 // pred_region
          %1654 = vsyncadd %s1641, 0
          %s1655 = sadd.s32 %s32, %s31
          %s1656 = smul.addr %s1655, 8
          %s1657 = scalar_lea.hbm %s8, %s1656
          %s1659 = sshll.u32 %s1644, 4
          %s1660 = int_to_ptr.vmem [resolvable:$true] %s1659
          %s1661 = sshll.u32 %s1657, 4
          %s1662 = int_to_ptr.hbm [resolvable:$true] %s1661
          %1664 = dma.vmem_to_hbm [thread:$0]  %s1660, 128, %s1662, %s1641
        $region56: #{multi_head_attention.1} parent=51 // pred_fallthru
          _
        // Predicated region
        $region57: #{multi_head_attention.1} parent=51 // pred_check
          %p1665 = pneg %p279
        $region58: #{multi_head_attention.1} parent=51 // pred_check_branch
          %1667 = sbr.rel (%p1665) target = $region60
        $region59: #{multi_head_attention.1} parent=51 // pred_region
          %1669 = vsyncadd %s1646, 0
          %s1670 = smul.addr %s31, 8
          %s1671 = sadd.s32 %s32, %s1670
          %s1672 = smul.addr %s1671, 4
          %s1673 = scalar_lea.hbm %s9, %s1672
          %s1674 = sshll.u32 %s1649, 4
          %s1675 = int_to_ptr.vmem [resolvable:$true] %s1674
          %s1676 = sshll.u32 %s1673, 4
          %s1677 = int_to_ptr.hbm [resolvable:$true] %s1676
          %1682 = dma.vmem_to_hbm [thread:$0]  %s1675, 512, %s1677, %s1646, 64, 64, 4
        $region60: #{multi_head_attention.1} parent=51 // pred_fallthru
          _
      $region52: #{multi_head_attention.1} parent=5 // pred_fallthru
        _
      %p1683 = scmp.le.s32.totalorder 2, %s22
      // Predicated region
      $region61: #{multi_head_attention.1} parent=5 // pred_check
        %p1684 = pneg %p1683
      $region62: #{multi_head_attention.1} parent=5 // pred_check_branch
        %1686 = sbr.rel (%p1684) target = $region64
      $region63: #{multi_head_attention.1} parent=5 // pred_region
        %s1687 = ssub.s32 %s22, 2
        // Predicated region
        $region65: #{multi_head_attention.1} parent=63 // pred_check
          %p1688 = pneg %p257
        $region66: #{multi_head_attention.1} parent=63 // pred_check_branch
          %1690 = sbr.rel (%p1688) target = $region68
        $region67: #{multi_head_attention.1} parent=63 // pred_region
          %s1691 = sand.u32 %s242, 1
          %s1692 = scalar_lea.sflag [#allocation4], %s1691
          %s1693 = sand.u32 %s242, 1
          %s1694 = smul.addr %s1693, 8
          %s1695 = scalar_lea.vmem [#allocation3], %s1694
          %1697 = dma.done %s1692, 128
        $region68: #{multi_head_attention.1} parent=63 // pred_fallthru
          _
        // Predicated region
        $region69: #{multi_head_attention.1} parent=63 // pred_check
          %p1698 = pneg %p285
        $region70: #{multi_head_attention.1} parent=63 // pred_check_branch
          %1700 = sbr.rel (%p1698) target = $region72
        $region71: #{multi_head_attention.1} parent=63 // pred_region
          %s1701 = sand.u32 %s270, 1
          %s1702 = scalar_lea.sflag [#allocation6], %s1701
          %s1703 = sand.u32 %s270, 1
          %s1704 = smul.addr %s1703, 32
          %s1705 = scalar_lea.vmem [#allocation5], %s1704
          %1707 = dma.done %s1702, 512
        $region72: #{multi_head_attention.1} parent=63 // pred_fallthru
          _
      $region64: #{multi_head_attention.1} parent=5 // pred_fallthru
        _
    $region6: #{multi_head_attention.1} parent=1 // loop_footer
      %s26 = sadd.s32 1, %s22
    $region7: #{multi_head_attention.1} parent=1 // loop_footer_branch
      %21 = sbr.rel target = $region3
    $region8: #{multi_head_attention.1} parent=1 // loop_exit
      _
    %1708 = vsyncpa [#allocation4], 1
    %s1709 = scalar_lea.sflag [#allocation4], 1
    %1710 = vsyncpa %s1709, 1
    %1711 = vsyncpa [#allocation6], 1
    %s1712 = scalar_lea.sflag [#allocation6], 1
    %1713 = vsyncpa %s1712, 1

</llo_original>
